<compile_context>
chip_gen: v7x
topology: tpu7x:2x2x1
jax: 0.10.0
libtpu: 0.0.40
codegen_flags: <defaults>
</compile_context>

<pallas_src>
import functools

import jax
import jax.numpy as jnp
from jax.experimental import pallas as pl
from jax.experimental.pallas import tpu as pltpu

EPS = 1e-5                       # torch BatchNorm1d default eps
_VMEM_LIMIT = 32 * 1024 * 1024   # scoped-VMEM budget (fits v5e/v6e/v7x)


# ---------------------------------------------------------------------------
# Tiling helpers.
# ---------------------------------------------------------------------------
def _round_up(x, m):
    return -(-x // m) * m


def _pick_point_tile(n, target=2048, align=16):
    """Return (points-per-tile, padded point count).

    The tile is 16-aligned (bf16 sublane packing), divides the padded point
    count, and keeps per-cloud padding small."""
    target = max(target, align)
    n_al = _round_up(n, align)
    if n_al <= target:
        return n_al, n_al
    best = None
    for t in range(target - target % align, align - 1, -align):
        pad = (-n) % t
        if 16 * pad <= n:                       # <= 6.25% padding waste
            return t, n + pad
        if best is None or pad < best[1]:
            best = (t, pad)
    t, pad = best
    return t, n + pad


def _pick_batch_tile(b, tn, cin, cout, *, row_target=4096, f32_budget=8 << 20):
    """Clouds per grid step: divides b, targets ~row_target rows/step, and
    keeps the per-step f32 intermediates within a VMEM budget."""
    rows_cap = min(max(tn, row_target), max(tn, f32_budget // (4 * (cin + cout))))
    tb = max(1, min(b, rows_cap // tn))
    while b % tb:
        tb -= 1
    return tb


# ---------------------------------------------------------------------------
# Backbone layer kernel: [BN(prev) + ReLU] -> matmul -> fused stats
#   layers 1-4: also stream the pre-BN output back to HBM in bf16
#   layer 5   : instead keep per-cloud max/min resident (fused max-pool)
# ---------------------------------------------------------------------------
def _backbone_layer_kernel(x_ref, scale_ref, shift_ref, w_ref, *out_refs,
                           first, last, n_pts, n_pad):
    if last:
        s_ref, ss_ref, hmax_ref, hmin_ref = out_refs
    else:
        h_ref, s_ref, ss_ref = out_refs

    bt = pl.program_id(0)                       # batch-tile index
    j = pl.program_id(1)                        # point-tile index
    tb, tn, cin = x_ref.shape
    cout = w_ref.shape[1]
    padded = n_pad != n_pts                     # static (trace-time) flag

    x = x_ref[...]
    if first:
        # Layer 1: no preceding BN/ReLU; f32 K=8 matmul keeps input precision
        # (the MXU is idle here anyway, and the zero-padded lanes contribute 0).
        a = x.astype(jnp.float32)
    else:
        # Previous layer's train-mode BN (folded scale/shift) + ReLU.
        a = jnp.maximum(x.astype(jnp.float32) * scale_ref[...] + shift_ref[...], 0.0)

    valid = None
    if padded:
        pid = j * tn + jax.lax.broadcasted_iota(jnp.int32, (1, tn, 1), 1)
        valid = pid < n_pts                     # (1, tn, 1)
        if not first:
            # Padded points must stay exactly zero so they neither bias the
            # fused batch statistics nor feed garbage into the matmul.
            # (For layer 1 the input is already zero-padded.)
            a = jnp.where(valid, a, 0.0)

    # MXU matmul with f32 accumulation (bf16 operands for layers 2-5).
    h2 = jnp.dot(a.reshape(tb * tn, cin).astype(w_ref.dtype), w_ref[...],
                 preferred_element_type=jnp.float32)        # (tb*tn, cout)

    # Fused per-channel batch statistics of this layer's pre-BN output,
    # accumulated into (1, cout) outputs resident across the whole grid.
    # TODO(synk): E[x^2]-mean^2 in f32 can lose bits for |mean| >> std; a
    # shifted/Welford accumulation would be more robust.
    s_t = jnp.sum(h2, axis=0, keepdims=True)
    ss_t = jnp.sum(h2 * h2, axis=0, keepdims=True)

    @pl.when((bt == 0) & (j == 0))
    def _():
        s_ref[...] = s_t
        ss_ref[...] = ss_t

    @pl.when((bt != 0) | (j != 0))
    def _():
        s_ref[...] = s_ref[...] + s_t
        ss_ref[...] = ss_ref[...] + ss_t

    h3 = h2.reshape(tb, tn, cout)
    if last:
        # Fused adaptive_max_pool1d: per-cloud, per-channel max AND min of the
        # pre-BN output stay resident across the point-tile axis; BN5+ReLU+max
        # is reconstructed from them in the XLA glue.  Padded points are
        # pushed to -inf/+inf so they can never win the max/min.
        if padded:
            hmax_t = jnp.max(jnp.where(valid, h3, -jnp.inf), axis=1)[None]
            hmin_t = jnp.min(jnp.where(valid, h3, jnp.inf), axis=1)[None]
        else:
            hmax_t = jnp.max(h3, axis=1)[None]              # (1, tb, cout)
            hmin_t = jnp.min(h3, axis=1)[None]

        @pl.when(j == 0)
        def _():
            hmax_ref[...] = hmax_t
            hmin_ref[...] = hmin_t

        @pl.when(j != 0)
        def _():
            hmax_ref[...] = jnp.maximum(hmax_ref[...], hmax_t)
            hmin_ref[...] = jnp.minimum(hmin_ref[...], hmin_t)
    else:
        h_ref[...] = h3.astype(h_ref.dtype)     # stage pre-BN h (bf16) for next layer


def _run_backbone_layer(x, scale, shift, w, *, tb, tn, n_pts, first, last):
    B, NP, cin = x.shape
    cout = w.shape[1]
    kernel = functools.partial(_backbone_layer_kernel, first=first, last=last,
                               n_pts=n_pts, n_pad=NP)
    grid = (B // tb, NP // tn)

    in_specs = [
        pl.BlockSpec((tb, tn, cin), lambda bt, j: (bt, j, 0)),   # activations (stream)
        pl.BlockSpec((1, cin), lambda bt, j: (0, 0)),            # BN scale (resident)
        pl.BlockSpec((1, cin), lambda bt, j: (0, 0)),            # BN shift (resident)
        pl.BlockSpec((cin, cout), lambda bt, j: (0, 0)),         # weight   (resident)
    ]
    stat_shape = jax.ShapeDtypeStruct((1, cout), jnp.float32)
    stat_spec = pl.BlockSpec((1, cout), lambda bt, j: (0, 0))
    if last:
        out_shape = (stat_shape, stat_shape,
                     jax.ShapeDtypeStruct((B // tb, tb, cout), jnp.float32),  # hmax
                     jax.ShapeDtypeStruct((B // tb, tb, cout), jnp.float32))  # hmin
        out_specs = (stat_spec, stat_spec,
                     pl.BlockSpec((1, tb, cout), lambda bt, j: (bt, 0, 0)),
                     pl.BlockSpec((1, tb, cout), lambda bt, j: (bt, 0, 0)))
    else:
        out_shape = (jax.ShapeDtypeStruct((B, NP, cout), jnp.bfloat16),       # pre-BN h
                     stat_shape, stat_shape)
        out_specs = (pl.BlockSpec((tb, tn, cout), lambda bt, j: (bt, j, 0)),
                     stat_spec, stat_spec)

    return pl.pallas_call(
        kernel,
        grid=grid,
        out_shape=out_shape,
        in_specs=in_specs,
        out_specs=out_specs,
        compiler_params=pltpu.CompilerParams(
            # Stats (and the per-cloud max/min) accumulate across the grid,
            # so both axes are "arbitrary".
            # TODO(synk): on v7x, add a leading core-parallel axis with
            # per-core stat slabs to use both TensorCores.
            dimension_semantics=("arbitrary", "arbitrary"),
            vmem_limit_bytes=_VMEM_LIMIT,
        ),
    )(x, scale, shift, w)


# ---------------------------------------------------------------------------
# Projector: Linear(no bias) -> BatchNorm1d (train) -> ReLU -> Linear(no bias)
# Tiny (B rows); single VMEM-resident step.
# ---------------------------------------------------------------------------
def _projector_kernel(y_ref, wp1_ref, gp_ref, bp_ref, wp2_ref, z_ref):
    p = jnp.dot(y_ref[...].astype(jnp.bfloat16), wp1_ref[...],
                preferred_element_type=jnp.float32)
    mu = jnp.mean(p, axis=0, keepdims=True)
    d = p - mu
    var = jnp.mean(d * d, axis=0, keepdims=True)             # centered variance
    p = jnp.maximum(d * (gp_ref[...] * jax.lax.rsqrt(var + EPS)) + bp_ref[...], 0.0)
    z_ref[...] = jnp.dot(p.astype(jnp.bfloat16), wp2_ref[...],
                         preferred_element_type=jnp.float32)


def _run_projector(y, wp1, gp, bp, wp2):
    B = y.shape[0]
    P = wp2.shape[1]
    vmem = pl.BlockSpec(memory_space=pltpu.MemorySpace.VMEM)
    return pl.pallas_call(
        _projector_kernel,
        out_shape=jax.ShapeDtypeStruct((B, P), jnp.float32),
        in_specs=[vmem] * 5,
        out_specs=vmem,
        compiler_params=pltpu.CompilerParams(vmem_limit_bytes=_VMEM_LIMIT),
    )(y, wp1, gp, bp, wp2)


# ---------------------------------------------------------------------------
# Glue (tiny XLA ops between kernels).
# ---------------------------------------------------------------------------
def _bn_scale_shift(s, ss, gamma, beta, n):
    # Train-mode BatchNorm1d (biased variance), folded into scale/shift.
    mu = s / n
    var = jnp.maximum(ss / n - mu * mu, 0.0)   # clamp guards f32 cancellation
    scale = gamma * jax.lax.rsqrt(var + EPS)
    shift = beta - mu * scale
    return scale, shift


def simclr_pointnet_forward(x_bcn, params, *, point_tile_target=2048,
                            row_target=4096):
    """x_bcn: (B, 3, N) float32, PyTorch NCW Conv1d layout.  Returns (y, z)."""
    B, C, N = x_bcn.shape
    assert C == 3
    tn, NP = _pick_point_tile(N, point_tile_target)

    # Channels-last (B, N_pad, C): channels on lanes so each kernel_size=1
    # Conv1d is a plain matmul.  Channels zero-padded 3 -> 8 so layer 1 also
    # runs on the MXU; points zero-padded per cloud to the tile multiple.
    x = jnp.transpose(x_bcn, (0, 2, 1))
    x = jnp.pad(x, ((0, 0), (0, NP - N), (0, 8 - C)))
    w1 = jnp.pad(params["w1"], ((0, 8 - C), (0, 0)))          # (8, 64) f32

    n_valid = jnp.float32(B * N)
    h = x
    scale = jnp.ones((1, 8), jnp.float32)      # unused by the first layer
    shift = jnp.zeros((1, 8), jnp.float32)
    hmax = hmin = None
    for i in range(1, 6):
        first, last = i == 1, i == 5
        w = w1 if first else params[f"w{i}"].astype(jnp.bfloat16)
        cin, cout = w.shape
        tb = _pick_batch_tile(B, tn, cin, cout, row_target=row_target)
        outs = _run_backbone_layer(h, scale, shift, w, tb=tb, tn=tn,
                                   n_pts=N, first=first, last=last)
        if last:
            s, ss, hmax, hmin = outs
        else:
            h, s, ss = outs
        scale, shift = _bn_scale_shift(s, ss, params[f"g{i}"], params[f"b{i}"],
                                       n_valid)

    # Fused F.adaptive_max_pool1d(relu(bn5(h5)), 1): BN5 is per-channel affine,
    # so the pooled value comes from the pre-BN per-cloud max/min.
    E = params["w5"].shape[1]
    hmax = hmax.reshape(B, E)
    hmin = hmin.reshape(B, E)
    y = jnp.maximum(jnp.where(scale >= 0.0, scale * hmax, scale * hmin) + shift, 0.0)

    # Projector head on the tiny (B, E) pooled features.
    z = _run_projector(y, params["wp1"].astype(jnp.bfloat16), params["gp"],
                       params["bp"], params["wp2"].astype(jnp.bfloat16))

    # TODO(synk): the `pesudo`/fc=True classifier head (nn.Linear(emb_dims, 40))
    # is not exercised by the default forward (fc=False) and is omitted.
    return y, z


# ---------------------------------------------------------------------------
# Synthetic parameters + pure-jnp reference (mimics the kernel numerics).
# ---------------------------------------------------------------------------
def init_params(key, emb_dims, mlp_hidden, proj_size):
    dims = [(3, 64), (64, 64), (64, 64), (64, 128), (128, emb_dims)]
    params = {}
    keys = iter(jax.random.split(key, 3 * len(dims) + 4))
    for i, (cin, cout) in enumerate(dims, start=1):
        params[f"w{i}"] = ((2.0 / cin) ** 0.5) * jax.random.normal(
            next(keys), (cin, cout), jnp.float32)
        params[f"g{i}"] = 1.0 + 0.1 * jax.random.normal(
            next(keys), (1, cout), jnp.float32)
        params[f"b{i}"] = 0.1 * jax.random.normal(
            next(keys), (1, cout), jnp.float32)
    params["wp1"] = ((2.0 / emb_dims) ** 0.5) * jax.random.normal(
        next(keys), (emb_dims, mlp_hidden), jnp.float32)
    params["gp"] = 1.0 + 0.1 * jax.random.normal(
        next(keys), (1, mlp_hidden), jnp.float32)
    params["bp"] = 0.1 * jax.random.normal(
        next(keys), (1, mlp_hidden), jnp.float32)
    params["wp2"] = ((2.0 / mlp_hidden) ** 0.5) * jax.random.normal(
        next(keys), (mlp_hidden, proj_size), jnp.float32)
    return params


def _reference_forward(x_bcn, params):
    """Pure-jnp reference matching the kernel numerics (bf16 matmul operands,
    bf16-staged inter-layer activations, train-mode batch statistics)."""
    B, C, N = x_bcn.shape
    n = jnp.float32(B * N)
    x = jnp.transpose(x_bcn, (0, 2, 1)).reshape(B * N, C)
    h = x @ params["w1"]                                      # f32 pre-BN h1
    for i in range(1, 5):
        scale, shift = _bn_scale_shift(jnp.sum(h, axis=0, keepdims=True),
                                       jnp.sum(h * h, axis=0, keepdims=True),
                                       params[f"g{i}"], params[f"b{i}"], n)
        a = jnp.maximum(
            h.astype(jnp.bfloat16).astype(jnp.float32) * scale + shift, 0.0)
        h = jnp.dot(a.astype(jnp.bfloat16),
                    params[f"w{i + 1}"].astype(jnp.bfloat16),
                    preferred_element_type=jnp.float32)
    scale, shift = _bn_scale_shift(jnp.sum(h, axis=0, keepdims=True),
                                   jnp.sum(h * h, axis=0, keepdims=True),
                                   params["g5"], params["b5"], n)
    E = params["w5"].shape[1]
    a5 = jnp.maximum(h * scale + shift, 0.0)                  # (B*N, E)
    y = jnp.max(a5.reshape(B, N, E), axis=1)
    p = jnp.dot(y.astype(jnp.bfloat16), params["wp1"].astype(jnp.bfloat16),
                preferred_element_type=jnp.float32)
    mu = jnp.mean(p, axis=0, keepdims=True)
    d = p - mu
    var = jnp.mean(d * d, axis=0, keepdims=True)
    p = jnp.maximum(d * (params["gp"] * jax.lax.rsqrt(var + EPS)) + params["bp"], 0.0)
    z = jnp.dot(p.astype(jnp.bfloat16), params["wp2"].astype(jnp.bfloat16),
                preferred_element_type=jnp.float32)
    return y, z


if __name__ == "__main__":
    # Small shapes consistent with the module: batch=2, 3 input channels,
    # N=20 points (exercises the per-cloud padding / masking path),
    # emb_dims=32, mlp_hidden_size=64, projection_size=16.
    hparams = {"emb_dims": 32, "mlp_hidden_size": 64, "projection_size": 16}
    B, N = 2, 20

    key = jax.random.PRNGKey(0)
    kx, kp = jax.random.split(key)
    x = jax.random.normal(kx, (B, 3, N), jnp.float32)   # NCW like torch Conv1d
    params = init_params(kp, hparams["emb_dims"], hparams["mlp_hidden_size"],
                         hparams["projection_size"])

    y, z = jax.jit(simclr_pointnet_forward)(x, params)
    jax.block_until_ready((y, z))
    assert y.shape == (B, hparams["emb_dims"])
    assert z.shape == (B, hparams["projection_size"])

    y_ref, z_ref = _reference_forward(x, params)
    assert bool(jnp.allclose(y, y_ref, rtol=2e-2, atol=2e-2)), "y mismatch vs reference"
    assert bool(jnp.allclose(z, z_ref, rtol=2e-2, atol=2e-2)), "z mismatch vs reference"
    print("KERNEL_OK")
</pallas_src>

<mosaic_0001>
module attributes {stable_mosaic.version = 11 : i64} {
  func.func @_backbone_layer_kernel(%arg0: i32, %arg1: i32, %arg2: memref<2x32x8xf32, #tpu.memory_space<vmem>>, %arg3: memref<1x8xf32, #tpu.memory_space<vmem>>, %arg4: memref<1x8xf32, #tpu.memory_space<vmem>>, %arg5: memref<8x64xf32, #tpu.memory_space<vmem>>, %arg6: memref<2x32x64xbf16, #tpu.memory_space<vmem>>, %arg7: memref<1x64xf32, #tpu.memory_space<vmem>>, %arg8: memref<1x64xf32, #tpu.memory_space<vmem>>) attributes {dimension_semantics = [#tpu.dimension_semantics<arbitrary>, #tpu.dimension_semantics<arbitrary>], iteration_bounds = array<i64: 1, 1>, scalar_prefetch = 0 : i64, scratch_operands = 0 : i64, tpu.core_type = #tpu.core_type<tc>, window_params = [{transform_indices = @transform_0, window_bounds = array<i64: 2, 32, 8>}, {pipeline_mode = #tpu.pipeline_mode<synchronous>, transform_indices = @transform_1, window_bounds = array<i64: 1, 8>}, {pipeline_mode = #tpu.pipeline_mode<synchronous>, transform_indices = @transform_2, window_bounds = array<i64: 1, 8>}, {pipeline_mode = #tpu.pipeline_mode<synchronous>, transform_indices = @transform_3, window_bounds = array<i64: 8, 64>}, {transform_indices = @transform_4, window_bounds = array<i64: 2, 32, 64>}, {pipeline_mode = #tpu.pipeline_mode<synchronous>, transform_indices = @transform_5, window_bounds = array<i64: 1, 64>}, {pipeline_mode = #tpu.pipeline_mode<synchronous>, transform_indices = @transform_6, window_bounds = array<i64: 1, 64>}]} {
    %c0 = arith.constant 0 : index
    %c0_0 = arith.constant 0 : index
    %c0_1 = arith.constant 0 : index
    %0 = vector.load %arg2[%c0, %c0_0, %c0_1] : memref<2x32x8xf32, #tpu.memory_space<vmem>>, vector<2x32x8xf32>
    %1 = vector.shape_cast %0 : vector<2x32x8xf32> to vector<64x8xf32>
    %c0_2 = arith.constant 0 : index
    %c0_3 = arith.constant 0 : index
    %2 = vector.load %arg5[%c0_2, %c0_3] : memref<8x64xf32, #tpu.memory_space<vmem>>, vector<8x64xf32>
    %cst = arith.constant dense<0.000000e+00> : vector<64x64xf32>
    %3 = tpu.matmul %1, %2, %cst {dimension_numbers = #tpu.dot_dimension_numbers<[1], [0], [0], [1], [0, 0, 1, 1], [], []>} : vector<64x8xf32>, vector<8x64xf32>, vector<64x64xf32> -> vector<64x64xf32>
    %cst_4 = arith.constant dense<0.000000e+00> : vector<64xf32>
    %4 = vector.multi_reduction <add>, %3, %cst_4 [0] : vector<64x64xf32> to vector<64xf32>
    %5 = vector.shape_cast %4 : vector<64xf32> to vector<1x64xf32>
    %6 = arith.mulf %3, %3 : vector<64x64xf32>
    %cst_5 = arith.constant dense<0.000000e+00> : vector<64xf32>
    %7 = vector.multi_reduction <add>, %6, %cst_5 [0] : vector<64x64xf32> to vector<64xf32>
    %8 = vector.shape_cast %7 : vector<64xf32> to vector<1x64xf32>
    %c0_i32 = arith.constant 0 : i32
    %9 = arith.cmpi eq, %arg0, %c0_i32 : i32
    %c0_i32_6 = arith.constant 0 : i32
    %10 = arith.cmpi eq, %arg1, %c0_i32_6 : i32
    %11 = arith.andi %9, %10 : i1
    %12 = arith.extui %11 : i1 to i32
    %c0_i32_7 = arith.constant 0 : i32
    %13 = arith.cmpi ne, %12, %c0_i32_7 : i32
    scf.if %13 {
      %c0_14 = arith.constant 0 : index
      %c0_15 = arith.constant 0 : index
      %22 = vector.load %arg7[%c0_14, %c0_15] : memref<1x64xf32, #tpu.memory_space<vmem>>, vector<1x64xf32>
      tpu.vector_store %arg7[%c0_14, %c0_15], %5 {strides = array<i32>} : memref<1x64xf32, #tpu.memory_space<vmem>>, vector<1x64xf32>,
      %c0_16 = arith.constant 0 : index
      %c0_17 = arith.constant 0 : index
      %23 = vector.load %arg8[%c0_16, %c0_17] : memref<1x64xf32, #tpu.memory_space<vmem>>, vector<1x64xf32>
      tpu.vector_store %arg8[%c0_16, %c0_17], %8 {strides = array<i32>} : memref<1x64xf32, #tpu.memory_space<vmem>>, vector<1x64xf32>,
    } else {
    }
    %c0_i32_8 = arith.constant 0 : i32
    %14 = arith.cmpi ne, %arg0, %c0_i32_8 : i32
    %c0_i32_9 = arith.constant 0 : i32
    %15 = arith.cmpi ne, %arg1, %c0_i32_9 : i32
    %16 = arith.ori %14, %15 : i1
    %17 = arith.extui %16 : i1 to i32
    %c0_i32_10 = arith.constant 0 : i32
    %18 = arith.cmpi ne, %17, %c0_i32_10 : i32
    scf.if %18 {
      %c0_14 = arith.constant 0 : index
      %c0_15 = arith.constant 0 : index
      %22 = vector.load %arg7[%c0_14, %c0_15] : memref<1x64xf32, #tpu.memory_space<vmem>>, vector<1x64xf32>
      %23 = arith.addf %22, %5 : vector<1x64xf32>
      %c0_16 = arith.constant 0 : index
      %c0_17 = arith.constant 0 : index
      %24 = vector.load %arg7[%c0_16, %c0_17] : memref<1x64xf32, #tpu.memory_space<vmem>>, vector<1x64xf32>
      tpu.vector_store %arg7[%c0_16, %c0_17], %23 {strides = array<i32>} : memref<1x64xf32, #tpu.memory_space<vmem>>, vector<1x64xf32>,
      %c0_18 = arith.constant 0 : index
      %c0_19 = arith.constant 0 : index
      %25 = vector.load %arg8[%c0_18, %c0_19] : memref<1x64xf32, #tpu.memory_space<vmem>>, vector<1x64xf32>
      %26 = arith.addf %25, %8 : vector<1x64xf32>
      %c0_20 = arith.constant 0 : index
      %c0_21 = arith.constant 0 : index
      %27 = vector.load %arg8[%c0_20, %c0_21] : memref<1x64xf32, #tpu.memory_space<vmem>>, vector<1x64xf32>
      tpu.vector_store %arg8[%c0_20, %c0_21], %26 {strides = array<i32>} : memref<1x64xf32, #tpu.memory_space<vmem>>, vector<1x64xf32>,
    } else {
    }
    %19 = vector.shape_cast %3 : vector<64x64xf32> to vector<2x32x64xf32>
    %20 = arith.truncf %19 : vector<2x32x64xf32> to vector<2x32x64xbf16>
    %c0_11 = arith.constant 0 : index
    %c0_12 = arith.constant 0 : index
    %c0_13 = arith.constant 0 : index
    %21 = vector.load %arg6[%c0_11, %c0_12, %c0_13] : memref<2x32x64xbf16, #tpu.memory_space<vmem>>, vector<2x32x64xbf16>
    tpu.vector_store %arg6[%c0_11, %c0_12, %c0_13], %20 {strides = array<i32>} : memref<2x32x64xbf16, #tpu.memory_space<vmem>>, vector<2x32x64xbf16>,
    return
  }
  func.func @transform_0(%arg0: i32, %arg1: i32) -> (i32, i32, i32) {
    %c0_i32 = arith.constant 0 : i32
    %c0_i32_0 = arith.constant 0 : i32
    return %arg0, %arg1, %c0_i32 : i32, i32, i32
  }
  func.func @transform_1(%arg0: i32, %arg1: i32) -> (i32, i32) {
    %c0_i32 = arith.constant 0 : i32
    %c0_i32_0 = arith.constant 0 : i32
    %c0_i32_1 = arith.constant 0 : i32
    return %c0_i32, %c0_i32_0 : i32, i32
  }
  func.func @transform_2(%arg0: i32, %arg1: i32) -> (i32, i32) {
    %c0_i32 = arith.constant 0 : i32
    %c0_i32_0 = arith.constant 0 : i32
    %c0_i32_1 = arith.constant 0 : i32
    return %c0_i32, %c0_i32_0 : i32, i32
  }
  func.func @transform_3(%arg0: i32, %arg1: i32) -> (i32, i32) {
    %c0_i32 = arith.constant 0 : i32
    %c0_i32_0 = arith.constant 0 : i32
    %c0_i32_1 = arith.constant 0 : i32
    return %c0_i32, %c0_i32_0 : i32, i32
  }
  func.func @transform_4(%arg0: i32, %arg1: i32) -> (i32, i32, i32) {
    %c0_i32 = arith.constant 0 : i32
    %c0_i32_0 = arith.constant 0 : i32
    return %arg0, %arg1, %c0_i32 : i32, i32, i32
  }
  func.func @transform_5(%arg0: i32, %arg1: i32) -> (i32, i32) {
    %c0_i32 = arith.constant 0 : i32
    %c0_i32_0 = arith.constant 0 : i32
    %c0_i32_1 = arith.constant 0 : i32
    return %c0_i32, %c0_i32_0 : i32, i32
  }
  func.func @transform_6(%arg0: i32, %arg1: i32) -> (i32, i32) {
    %c0_i32 = arith.constant 0 : i32
    %c0_i32_0 = arith.constant 0 : i32
    %c0_i32_1 = arith.constant 0 : i32
    return %c0_i32, %c0_i32_0 : i32, i32
  }
}

module attributes {stable_mosaic.version = 11 : i64} {
  func.func @_backbone_layer_kernel(%arg0: i32, %arg1: i32, %arg2: memref<2x32x64xbf16, #tpu.memory_space<vmem>>, %arg3: memref<1x64xf32, #tpu.memory_space<vmem>>, %arg4: memref<1x64xf32, #tpu.memory_space<vmem>>, %arg5: memref<64x64xbf16, #tpu.memory_space<vmem>>, %arg6: memref<2x32x64xbf16, #tpu.memory_space<vmem>>, %arg7: memref<1x64xf32, #tpu.memory_space<vmem>>, %arg8: memref<1x64xf32, #tpu.memory_space<vmem>>) attributes {dimension_semantics = [#tpu.dimension_semantics<arbitrary>, #tpu.dimension_semantics<arbitrary>], iteration_bounds = array<i64: 1, 1>, scalar_prefetch = 0 : i64, scratch_operands = 0 : i64, tpu.core_type = #tpu.core_type<tc>, window_params = [{transform_indices = @transform_0, window_bounds = array<i64: 2, 32, 64>}, {pipeline_mode = #tpu.pipeline_mode<synchronous>, transform_indices = @transform_1, window_bounds = array<i64: 1, 64>}, {pipeline_mode = #tpu.pipeline_mode<synchronous>, transform_indices = @transform_2, window_bounds = array<i64: 1, 64>}, {pipeline_mode = #tpu.pipeline_mode<synchronous>, transform_indices = @transform_3, window_bounds = array<i64: 64, 64>}, {transform_indices = @transform_4, window_bounds = array<i64: 2, 32, 64>}, {pipeline_mode = #tpu.pipeline_mode<synchronous>, transform_indices = @transform_5, window_bounds = array<i64: 1, 64>}, {pipeline_mode = #tpu.pipeline_mode<synchronous>, transform_indices = @transform_6, window_bounds = array<i64: 1, 64>}]} {
    %c0 = arith.constant 0 : index
    %c0_0 = arith.constant 0 : index
    %c0_1 = arith.constant 0 : index
    %0 = vector.load %arg2[%c0, %c0_0, %c0_1] : memref<2x32x64xbf16, #tpu.memory_space<vmem>>, vector<2x32x64xbf16>
    %1 = arith.extf %0 : vector<2x32x64xbf16> to vector<2x32x64xf32>
    %c0_2 = arith.constant 0 : index
    %c0_3 = arith.constant 0 : index
    %2 = vector.load %arg3[%c0_2, %c0_3] : memref<1x64xf32, #tpu.memory_space<vmem>>, vector<1x64xf32>
    %3 = vector.shape_cast %2 : vector<1x64xf32> to vector<1x1x64xf32>
    %4 = vector.broadcast %3 : vector<1x1x64xf32> to vector<2x32x64xf32>
    %5 = arith.mulf %1, %4 : vector<2x32x64xf32>
    %c0_4 = arith.constant 0 : index
    %c0_5 = arith.constant 0 : index
    %6 = vector.load %arg4[%c0_4, %c0_5] : memref<1x64xf32, #tpu.memory_space<vmem>>, vector<1x64xf32>
    %7 = vector.shape_cast %6 : vector<1x64xf32> to vector<1x1x64xf32>
    %8 = vector.broadcast %7 : vector<1x1x64xf32> to vector<2x32x64xf32>
    %9 = arith.addf %5, %8 : vector<2x32x64xf32>
    %cst = arith.constant 0.000000e+00 : f32
    %10 = vector.broadcast %cst : f32 to vector<2x32x64xf32>
    %11 = arith.maximumf %9, %10 : vector<2x32x64xf32>
    %c32_i32 = arith.constant 32 : i32
    %12 = arith.muli %arg1, %c32_i32 : i32
    %13 = tpu.iota {dimensions = array<i32: 1>} : vector<1x32x1xi32>
    %14 = vector.broadcast %12 : i32 to vector<1x32x1xi32>
    %15 = arith.addi %14, %13 : vector<1x32x1xi32>
    %c20_i32 = arith.constant 20 : i32
    %16 = vector.broadcast %c20_i32 : i32 to vector<1x32x1xi32>
    %17 = arith.cmpi slt, %15, %16 : vector<1x32x1xi32>
    %cst_6 = arith.constant 0.000000e+00 : f32
    %18 = vector.shape_cast %17 : vector<1x32x1xi1> to vector<1x32x1xi1>
    %19 = vector.broadcast %18 : vector<1x32x1xi1> to vector<2x32x64xi1>
    %20 = vector.broadcast %cst_6 : f32 to vector<2x32x64xf32>
    %21 = arith.select %19, %11, %20 : vector<2x32x64xi1>, vector<2x32x64xf32>
    %22 = vector.shape_cast %21 : vector<2x32x64xf32> to vector<64x64xf32>
    %23 = arith.truncf %22 : vector<64x64xf32> to vector<64x64xbf16>
    %c0_7 = arith.constant 0 : index
    %c0_8 = arith.constant 0 : index
    %24 = vector.load %arg5[%c0_7, %c0_8] : memref<64x64xbf16, #tpu.memory_space<vmem>>, vector<64x64xbf16>
    %cst_9 = arith.constant dense<0.000000e+00> : vector<64x64xf32>
    %25 = tpu.matmul %23, %24, %cst_9 {dimension_numbers = #tpu.dot_dimension_numbers<[1], [0], [0], [1], [0, 0, 1, 1], [], []>} : vector<64x64xbf16>, vector<64x64xbf16>, vector<64x64xf32> -> vector<64x64xf32>
    %cst_10 = arith.constant dense<0.000000e+00> : vector<64xf32>
    %26 = vector.multi_reduction <add>, %25, %cst_10 [0] : vector<64x64xf32> to vector<64xf32>
    %27 = vector.shape_cast %26 : vector<64xf32> to vector<1x64xf32>
    %28 = arith.mulf %25, %25 : vector<64x64xf32>
    %cst_11 = arith.constant dense<0.000000e+00> : vector<64xf32>
    %29 = vector.multi_reduction <add>, %28, %cst_11 [0] : vector<64x64xf32> to vector<64xf32>
    %30 = vector.shape_cast %29 : vector<64xf32> to vector<1x64xf32>
    %c0_i32 = arith.constant 0 : i32
    %31 = arith.cmpi eq, %arg0, %c0_i32 : i32
    %c0_i32_12 = arith.constant 0 : i32
    %32 = arith.cmpi eq, %arg1, %c0_i32_12 : i32
    %33 = arith.andi %31, %32 : i1
    %34 = arith.extui %33 : i1 to i32
    %c0_i32_13 = arith.constant 0 : i32
    %35 = arith.cmpi ne, %34, %c0_i32_13 : i32
    scf.if %35 {
      %c0_20 = arith.constant 0 : index
      %c0_21 = arith.constant 0 : index
      %44 = vector.load %arg7[%c0_20, %c0_21] : memref<1x64xf32, #tpu.memory_space<vmem>>, vector<1x64xf32>
      tpu.vector_store %arg7[%c0_20, %c0_21], %27 {strides = array<i32>} : memref<1x64xf32, #tpu.memory_space<vmem>>, vector<1x64xf32>,
      %c0_22 = arith.constant 0 : index
      %c0_23 = arith.constant 0 : index
      %45 = vector.load %arg8[%c0_22, %c0_23] : memref<1x64xf32, #tpu.memory_space<vmem>>, vector<1x64xf32>
      tpu.vector_store %arg8[%c0_22, %c0_23], %30 {strides = array<i32>} : memref<1x64xf32, #tpu.memory_space<vmem>>, vector<1x64xf32>,
    } else {
    }
    %c0_i32_14 = arith.constant 0 : i32
    %36 = arith.cmpi ne, %arg0, %c0_i32_14 : i32
    %c0_i32_15 = arith.constant 0 : i32
    %37 = arith.cmpi ne, %arg1, %c0_i32_15 : i32
    %38 = arith.ori %36, %37 : i1
    %39 = arith.extui %38 : i1 to i32
    %c0_i32_16 = arith.constant 0 : i32
    %40 = arith.cmpi ne, %39, %c0_i32_16 : i32
    scf.if %40 {
      %c0_20 = arith.constant 0 : index
      %c0_21 = arith.constant 0 : index
      %44 = vector.load %arg7[%c0_20, %c0_21] : memref<1x64xf32, #tpu.memory_space<vmem>>, vector<1x64xf32>
      %45 = arith.addf %44, %27 : vector<1x64xf32>
      %c0_22 = arith.constant 0 : index
      %c0_23 = arith.constant 0 : index
      %46 = vector.load %arg7[%c0_22, %c0_23] : memref<1x64xf32, #tpu.memory_space<vmem>>, vector<1x64xf32>
      tpu.vector_store %arg7[%c0_22, %c0_23], %45 {strides = array<i32>} : memref<1x64xf32, #tpu.memory_space<vmem>>, vector<1x64xf32>,
      %c0_24 = arith.constant 0 : index
      %c0_25 = arith.constant 0 : index
      %47 = vector.load %arg8[%c0_24, %c0_25] : memref<1x64xf32, #tpu.memory_space<vmem>>, vector<1x64xf32>
      %48 = arith.addf %47, %30 : vector<1x64xf32>
      %c0_26 = arith.constant 0 : index
      %c0_27 = arith.constant 0 : index
      %49 = vector.load %arg8[%c0_26, %c0_27] : memref<1x64xf32, #tpu.memory_space<vmem>>, vector<1x64xf32>
      tpu.vector_store %arg8[%c0_26, %c0_27], %48 {strides = array<i32>} : memref<1x64xf32, #tpu.memory_space<vmem>>, vector<1x64xf32>,
    } else {
    }
    %41 = vector.shape_cast %25 : vector<64x64xf32> to vector<2x32x64xf32>
    %42 = arith.truncf %41 : vector<2x32x64xf32> to vector<2x32x64xbf16>
    %c0_17 = arith.constant 0 : index
    %c0_18 = arith.constant 0 : index
    %c0_19 = arith.constant 0 : index
    %43 = vector.load %arg6[%c0_17, %c0_18, %c0_19] : memref<2x32x64xbf16, #tpu.memory_space<vmem>>, vector<2x32x64xbf16>
    tpu.vector_store %arg6[%c0_17, %c0_18, %c0_19], %42 {strides = array<i32>} : memref<2x32x64xbf16, #tpu.memory_space<vmem>>, vector<2x32x64xbf16>,
    return
  }
  func.func @transform_0(%arg0: i32, %arg1: i32) -> (i32, i32, i32) {
    %c0_i32 = arith.constant 0 : i32
    %c0_i32_0 = arith.constant 0 : i32
    return %arg0, %arg1, %c0_i32 : i32, i32, i32
  }
  func.func @transform_1(%arg0: i32, %arg1: i32) -> (i32, i32) {
    %c0_i32 = arith.constant 0 : i32
    %c0_i32_0 = arith.constant 0 : i32
    %c0_i32_1 = arith.constant 0 : i32
    return %c0_i32, %c0_i32_0 : i32, i32
  }
  func.func @transform_2(%arg0: i32, %arg1: i32) -> (i32, i32) {
    %c0_i32 = arith.constant 0 : i32
    %c0_i32_0 = arith.constant 0 : i32
    %c0_i32_1 = arith.constant 0 : i32
    return %c0_i32, %c0_i32_0 : i32, i32
  }
  func.func @transform_3(%arg0: i32, %arg1: i32) -> (i32, i32) {
    %c0_i32 = arith.constant 0 : i32
    %c0_i32_0 = arith.constant 0 : i32
    %c0_i32_1 = arith.constant 0 : i32
    return %c0_i32, %c0_i32_0 : i32, i32
  }
  func.func @transform_4(%arg0: i32, %arg1: i32) -> (i32, i32, i32) {
    %c0_i32 = arith.constant 0 : i32
    %c0_i32_0 = arith.constant 0 : i32
    return %arg0, %arg1, %c0_i32 : i32, i32, i32
  }
  func.func @transform_5(%arg0: i32, %arg1: i32) -> (i32, i32) {
    %c0_i32 = arith.constant 0 : i32
    %c0_i32_0 = arith.constant 0 : i32
    %c0_i32_1 = arith.constant 0 : i32
    return %c0_i32, %c0_i32_0 : i32, i32
  }
  func.func @transform_6(%arg0: i32, %arg1: i32) -> (i32, i32) {
    %c0_i32 = arith.constant 0 : i32
    %c0_i32_0 = arith.constant 0 : i32
    %c0_i32_1 = arith.constant 0 : i32
    return %c0_i32, %c0_i32_0 : i32, i32
  }
}

module attributes {stable_mosaic.version = 11 : i64} {
  func.func @_backbone_layer_kernel(%arg0: i32, %arg1: i32, %arg2: memref<2x32x64xbf16, #tpu.memory_space<vmem>>, %arg3: memref<1x64xf32, #tpu.memory_space<vmem>>, %arg4: memref<1x64xf32, #tpu.memory_space<vmem>>, %arg5: memref<64x128xbf16, #tpu.memory_space<vmem>>, %arg6: memref<2x32x128xbf16, #tpu.memory_space<vmem>>, %arg7: memref<1x128xf32, #tpu.memory_space<vmem>>, %arg8: memref<1x128xf32, #tpu.memory_space<vmem>>) attributes {dimension_semantics = [#tpu.dimension_semantics<arbitrary>, #tpu.dimension_semantics<arbitrary>], iteration_bounds = array<i64: 1, 1>, scalar_prefetch = 0 : i64, scratch_operands = 0 : i64, tpu.core_type = #tpu.core_type<tc>, window_params = [{transform_indices = @transform_0, window_bounds = array<i64: 2, 32, 64>}, {pipeline_mode = #tpu.pipeline_mode<synchronous>, transform_indices = @transform_1, window_bounds = array<i64: 1, 64>}, {pipeline_mode = #tpu.pipeline_mode<synchronous>, transform_indices = @transform_2, window_bounds = array<i64: 1, 64>}, {pipeline_mode = #tpu.pipeline_mode<synchronous>, transform_indices = @transform_3, window_bounds = array<i64: 64, 128>}, {transform_indices = @transform_4, window_bounds = array<i64: 2, 32, 128>}, {pipeline_mode = #tpu.pipeline_mode<synchronous>, transform_indices = @transform_5, window_bounds = array<i64: 1, 128>}, {pipeline_mode = #tpu.pipeline_mode<synchronous>, transform_indices = @transform_6, window_bounds = array<i64: 1, 128>}]} {
    %c0 = arith.constant 0 : index
    %c0_0 = arith.constant 0 : index
    %c0_1 = arith.constant 0 : index
    %0 = vector.load %arg2[%c0, %c0_0, %c0_1] : memref<2x32x64xbf16, #tpu.memory_space<vmem>>, vector<2x32x64xbf16>
    %1 = arith.extf %0 : vector<2x32x64xbf16> to vector<2x32x64xf32>
    %c0_2 = arith.constant 0 : index
    %c0_3 = arith.constant 0 : index
    %2 = vector.load %arg3[%c0_2, %c0_3] : memref<1x64xf32, #tpu.memory_space<vmem>>, vector<1x64xf32>
    %3 = vector.shape_cast %2 : vector<1x64xf32> to vector<1x1x64xf32>
    %4 = vector.broadcast %3 : vector<1x1x64xf32> to vector<2x32x64xf32>
    %5 = arith.mulf %1, %4 : vector<2x32x64xf32>
    %c0_4 = arith.constant 0 : index
    %c0_5 = arith.constant 0 : index
    %6 = vector.load %arg4[%c0_4, %c0_5] : memref<1x64xf32, #tpu.memory_space<vmem>>, vector<1x64xf32>
    %7 = vector.shape_cast %6 : vector<1x64xf32> to vector<1x1x64xf32>
    %8 = vector.broadcast %7 : vector<1x1x64xf32> to vector<2x32x64xf32>
    %9 = arith.addf %5, %8 : vector<2x32x64xf32>
    %cst = arith.constant 0.000000e+00 : f32
    %10 = vector.broadcast %cst : f32 to vector<2x32x64xf32>
    %11 = arith.maximumf %9, %10 : vector<2x32x64xf32>
    %c32_i32 = arith.constant 32 : i32
    %12 = arith.muli %arg1, %c32_i32 : i32
    %13 = tpu.iota {dimensions = array<i32: 1>} : vector<1x32x1xi32>
    %14 = vector.broadcast %12 : i32 to vector<1x32x1xi32>
    %15 = arith.addi %14, %13 : vector<1x32x1xi32>
    %c20_i32 = arith.constant 20 : i32
    %16 = vector.broadcast %c20_i32 : i32 to vector<1x32x1xi32>
    %17 = arith.cmpi slt, %15, %16 : vector<1x32x1xi32>
    %cst_6 = arith.constant 0.000000e+00 : f32
    %18 = vector.shape_cast %17 : vector<1x32x1xi1> to vector<1x32x1xi1>
    %19 = vector.broadcast %18 : vector<1x32x1xi1> to vector<2x32x64xi1>
    %20 = vector.broadcast %cst_6 : f32 to vector<2x32x64xf32>
    %21 = arith.select %19, %11, %20 : vector<2x32x64xi1>, vector<2x32x64xf32>
    %22 = vector.shape_cast %21 : vector<2x32x64xf32> to vector<64x64xf32>
    %23 = arith.truncf %22 : vector<64x64xf32> to vector<64x64xbf16>
    %c0_7 = arith.constant 0 : index
    %c0_8 = arith.constant 0 : index
    %24 = vector.load %arg5[%c0_7, %c0_8] : memref<64x128xbf16, #tpu.memory_space<vmem>>, vector<64x128xbf16>
    %cst_9 = arith.constant dense<0.000000e+00> : vector<64x128xf32>
    %25 = tpu.matmul %23, %24, %cst_9 {dimension_numbers = #tpu.dot_dimension_numbers<[1], [0], [0], [1], [0, 0, 1, 1], [], []>} : vector<64x64xbf16>, vector<64x128xbf16>, vector<64x128xf32> -> vector<64x128xf32>
    %cst_10 = arith.constant dense<0.000000e+00> : vector<128xf32>
    %26 = vector.multi_reduction <add>, %25, %cst_10 [0] : vector<64x128xf32> to vector<128xf32>
    %27 = vector.shape_cast %26 : vector<128xf32> to vector<1x128xf32>
    %28 = arith.mulf %25, %25 : vector<64x128xf32>
    %cst_11 = arith.constant dense<0.000000e+00> : vector<128xf32>
    %29 = vector.multi_reduction <add>, %28, %cst_11 [0] : vector<64x128xf32> to vector<128xf32>
    %30 = vector.shape_cast %29 : vector<128xf32> to vector<1x128xf32>
    %c0_i32 = arith.constant 0 : i32
    %31 = arith.cmpi eq, %arg0, %c0_i32 : i32
    %c0_i32_12 = arith.constant 0 : i32
    %32 = arith.cmpi eq, %arg1, %c0_i32_12 : i32
    %33 = arith.andi %31, %32 : i1
    %34 = arith.extui %33 : i1 to i32
    %c0_i32_13 = arith.constant 0 : i32
    %35 = arith.cmpi ne, %34, %c0_i32_13 : i32
    scf.if %35 {
      %c0_20 = arith.constant 0 : index
      %c0_21 = arith.constant 0 : index
      %44 = vector.load %arg7[%c0_20, %c0_21] : memref<1x128xf32, #tpu.memory_space<vmem>>, vector<1x128xf32>
      tpu.vector_store %arg7[%c0_20, %c0_21], %27 {strides = array<i32>} : memref<1x128xf32, #tpu.memory_space<vmem>>, vector<1x128xf32>,
      %c0_22 = arith.constant 0 : index
      %c0_23 = arith.constant 0 : index
      %45 = vector.load %arg8[%c0_22, %c0_23] : memref<1x128xf32, #tpu.memory_space<vmem>>, vector<1x128xf32>
      tpu.vector_store %arg8[%c0_22, %c0_23], %30 {strides = array<i32>} : memref<1x128xf32, #tpu.memory_space<vmem>>, vector<1x128xf32>,
    } else {
    }
    %c0_i32_14 = arith.constant 0 : i32
    %36 = arith.cmpi ne, %arg0, %c0_i32_14 : i32
    %c0_i32_15 = arith.constant 0 : i32
    %37 = arith.cmpi ne, %arg1, %c0_i32_15 : i32
    %38 = arith.ori %36, %37 : i1
    %39 = arith.extui %38 : i1 to i32
    %c0_i32_16 = arith.constant 0 : i32
    %40 = arith.cmpi ne, %39, %c0_i32_16 : i32
    scf.if %40 {
      %c0_20 = arith.constant 0 : index
      %c0_21 = arith.constant 0 : index
      %44 = vector.load %arg7[%c0_20, %c0_21] : memref<1x128xf32, #tpu.memory_space<vmem>>, vector<1x128xf32>
      %45 = arith.addf %44, %27 : vector<1x128xf32>
      %c0_22 = arith.constant 0 : index
      %c0_23 = arith.constant 0 : index
      %46 = vector.load %arg7[%c0_22, %c0_23] : memref<1x128xf32, #tpu.memory_space<vmem>>, vector<1x128xf32>
      tpu.vector_store %arg7[%c0_22, %c0_23], %45 {strides = array<i32>} : memref<1x128xf32, #tpu.memory_space<vmem>>, vector<1x128xf32>,
      %c0_24 = arith.constant 0 : index
      %c0_25 = arith.constant 0 : index
      %47 = vector.load %arg8[%c0_24, %c0_25] : memref<1x128xf32, #tpu.memory_space<vmem>>, vector<1x128xf32>
      %48 = arith.addf %47, %30 : vector<1x128xf32>
      %c0_26 = arith.constant 0 : index
      %c0_27 = arith.constant 0 : index
      %49 = vector.load %arg8[%c0_26, %c0_27] : memref<1x128xf32, #tpu.memory_space<vmem>>, vector<1x128xf32>
      tpu.vector_store %arg8[%c0_26, %c0_27], %48 {strides = array<i32>} : memref<1x128xf32, #tpu.memory_space<vmem>>, vector<1x128xf32>,
    } else {
    }
    %41 = vector.shape_cast %25 : vector<64x128xf32> to vector<2x32x128xf32>
    %42 = arith.truncf %41 : vector<2x32x128xf32> to vector<2x32x128xbf16>
    %c0_17 = arith.constant 0 : index
    %c0_18 = arith.constant 0 : index
    %c0_19 = arith.constant 0 : index
    %43 = vector.load %arg6[%c0_17, %c0_18, %c0_19] : memref<2x32x128xbf16, #tpu.memory_space<vmem>>, vector<2x32x128xbf16>
    tpu.vector_store %arg6[%c0_17, %c0_18, %c0_19], %42 {strides = array<i32>} : memref<2x32x128xbf16, #tpu.memory_space<vmem>>, vector<2x32x128xbf16>,
    return
  }
  func.func @transform_0(%arg0: i32, %arg1: i32) -> (i32, i32, i32) {
    %c0_i32 = arith.constant 0 : i32
    %c0_i32_0 = arith.constant 0 : i32
    return %arg0, %arg1, %c0_i32 : i32, i32, i32
  }
  func.func @transform_1(%arg0: i32, %arg1: i32) -> (i32, i32) {
    %c0_i32 = arith.constant 0 : i32
    %c0_i32_0 = arith.constant 0 : i32
    %c0_i32_1 = arith.constant 0 : i32
    return %c0_i32, %c0_i32_0 : i32, i32
  }
  func.func @transform_2(%arg0: i32, %arg1: i32) -> (i32, i32) {
    %c0_i32 = arith.constant 0 : i32
    %c0_i32_0 = arith.constant 0 : i32
    %c0_i32_1 = arith.constant 0 : i32
    return %c0_i32, %c0_i32_0 : i32, i32
  }
  func.func @transform_3(%arg0: i32, %arg1: i32) -> (i32, i32) {
    %c0_i32 = arith.constant 0 : i32
    %c0_i32_0 = arith.constant 0 : i32
    %c0_i32_1 = arith.constant 0 : i32
    return %c0_i32, %c0_i32_0 : i32, i32
  }
  func.func @transform_4(%arg0: i32, %arg1: i32) -> (i32, i32, i32) {
    %c0_i32 = arith.constant 0 : i32
    %c0_i32_0 = arith.constant 0 : i32
    return %arg0, %arg1, %c0_i32 : i32, i32, i32
  }
  func.func @transform_5(%arg0: i32, %arg1: i32) -> (i32, i32) {
    %c0_i32 = arith.constant 0 : i32
    %c0_i32_0 = arith.constant 0 : i32
    %c0_i32_1 = arith.constant 0 : i32
    return %c0_i32, %c0_i32_0 : i32, i32
  }
  func.func @transform_6(%arg0: i32, %arg1: i32) -> (i32, i32) {
    %c0_i32 = arith.constant 0 : i32
    %c0_i32_0 = arith.constant 0 : i32
    %c0_i32_1 = arith.constant 0 : i32
    return %c0_i32, %c0_i32_0 : i32, i32
  }
}

module attributes {stable_mosaic.version = 11 : i64} {
  func.func @_backbone_layer_kernel(%arg0: i32, %arg1: i32, %arg2: memref<2x32x128xbf16, #tpu.memory_space<vmem>>, %arg3: memref<1x128xf32, #tpu.memory_space<vmem>>, %arg4: memref<1x128xf32, #tpu.memory_space<vmem>>, %arg5: memref<128x32xbf16, #tpu.memory_space<vmem>>, %arg6: memref<1x32xf32, #tpu.memory_space<vmem>>, %arg7: memref<1x32xf32, #tpu.memory_space<vmem>>, %arg8: memref<1x2x32xf32, #tpu.memory_space<vmem>>, %arg9: memref<1x2x32xf32, #tpu.memory_space<vmem>>) attributes {dimension_semantics = [#tpu.dimension_semantics<arbitrary>, #tpu.dimension_semantics<arbitrary>], iteration_bounds = array<i64: 1, 1>, scalar_prefetch = 0 : i64, scratch_operands = 0 : i64, tpu.core_type = #tpu.core_type<tc>, window_params = [{transform_indices = @transform_0, window_bounds = array<i64: 2, 32, 128>}, {pipeline_mode = #tpu.pipeline_mode<synchronous>, transform_indices = @transform_1, window_bounds = array<i64: 1, 128>}, {pipeline_mode = #tpu.pipeline_mode<synchronous>, transform_indices = @transform_2, window_bounds = array<i64: 1, 128>}, {pipeline_mode = #tpu.pipeline_mode<synchronous>, transform_indices = @transform_3, window_bounds = array<i64: 128, 32>}, {pipeline_mode = #tpu.pipeline_mode<synchronous>, transform_indices = @transform_4, window_bounds = array<i64: 1, 32>}, {pipeline_mode = #tpu.pipeline_mode<synchronous>, transform_indices = @transform_5, window_bounds = array<i64: 1, 32>}, {transform_indices = @transform_6, window_bounds = array<i64: 1, 2, 32>}, {transform_indices = @transform_7, window_bounds = array<i64: 1, 2, 32>}]} {
    %c0 = arith.constant 0 : index
    %c0_0 = arith.constant 0 : index
    %c0_1 = arith.constant 0 : index
    %0 = vector.load %arg2[%c0, %c0_0, %c0_1] : memref<2x32x128xbf16, #tpu.memory_space<vmem>>, vector<2x32x128xbf16>
    %1 = arith.extf %0 : vector<2x32x128xbf16> to vector<2x32x128xf32>
    %c0_2 = arith.constant 0 : index
    %c0_3 = arith.constant 0 : index
    %2 = vector.load %arg3[%c0_2, %c0_3] : memref<1x128xf32, #tpu.memory_space<vmem>>, vector<1x128xf32>
    %3 = vector.shape_cast %2 : vector<1x128xf32> to vector<1x1x128xf32>
    %4 = vector.broadcast %3 : vector<1x1x128xf32> to vector<2x32x128xf32>
    %5 = arith.mulf %1, %4 : vector<2x32x128xf32>
    %c0_4 = arith.constant 0 : index
    %c0_5 = arith.constant 0 : index
    %6 = vector.load %arg4[%c0_4, %c0_5] : memref<1x128xf32, #tpu.memory_space<vmem>>, vector<1x128xf32>
    %7 = vector.shape_cast %6 : vector<1x128xf32> to vector<1x1x128xf32>
    %8 = vector.broadcast %7 : vector<1x1x128xf32> to vector<2x32x128xf32>
    %9 = arith.addf %5, %8 : vector<2x32x128xf32>
    %cst = arith.constant 0.000000e+00 : f32
    %10 = vector.broadcast %cst : f32 to vector<2x32x128xf32>
    %11 = arith.maximumf %9, %10 : vector<2x32x128xf32>
    %c32_i32 = arith.constant 32 : i32
    %12 = arith.muli %arg1, %c32_i32 : i32
    %13 = tpu.iota {dimensions = array<i32: 1>} : vector<1x32x1xi32>
    %14 = vector.broadcast %12 : i32 to vector<1x32x1xi32>
    %15 = arith.addi %14, %13 : vector<1x32x1xi32>
    %c20_i32 = arith.constant 20 : i32
    %16 = vector.broadcast %c20_i32 : i32 to vector<1x32x1xi32>
    %17 = arith.cmpi slt, %15, %16 : vector<1x32x1xi32>
    %cst_6 = arith.constant 0.000000e+00 : f32
    %18 = vector.shape_cast %17 : vector<1x32x1xi1> to vector<1x32x1xi1>
    %19 = vector.broadcast %18 : vector<1x32x1xi1> to vector<2x32x128xi1>
    %20 = vector.broadcast %cst_6 : f32 to vector<2x32x128xf32>
    %21 = arith.select %19, %11, %20 : vector<2x32x128xi1>, vector<2x32x128xf32>
    %22 = vector.shape_cast %21 : vector<2x32x128xf32> to vector<64x128xf32>
    %23 = arith.truncf %22 : vector<64x128xf32> to vector<64x128xbf16>
    %c0_7 = arith.constant 0 : index
    %c0_8 = arith.constant 0 : index
    %24 = vector.load %arg5[%c0_7, %c0_8] : memref<128x32xbf16, #tpu.memory_space<vmem>>, vector<128x32xbf16>
    %cst_9 = arith.constant dense<0.000000e+00> : vector<64x32xf32>
    %25 = tpu.matmul %23, %24, %cst_9 {dimension_numbers = #tpu.dot_dimension_numbers<[1], [0], [0], [1], [0, 0, 1, 1], [], []>} : vector<64x128xbf16>, vector<128x32xbf16>, vector<64x32xf32> -> vector<64x32xf32>
    %cst_10 = arith.constant dense<0.000000e+00> : vector<32xf32>
    %26 = vector.multi_reduction <add>, %25, %cst_10 [0] : vector<64x32xf32> to vector<32xf32>
    %27 = vector.shape_cast %26 : vector<32xf32> to vector<1x32xf32>
    %28 = arith.mulf %25, %25 : vector<64x32xf32>
    %cst_11 = arith.constant dense<0.000000e+00> : vector<32xf32>
    %29 = vector.multi_reduction <add>, %28, %cst_11 [0] : vector<64x32xf32> to vector<32xf32>
    %30 = vector.shape_cast %29 : vector<32xf32> to vector<1x32xf32>
    %c0_i32 = arith.constant 0 : i32
    %31 = arith.cmpi eq, %arg0, %c0_i32 : i32
    %c0_i32_12 = arith.constant 0 : i32
    %32 = arith.cmpi eq, %arg1, %c0_i32_12 : i32
    %33 = arith.andi %31, %32 : i1
    %34 = arith.extui %33 : i1 to i32
    %c0_i32_13 = arith.constant 0 : i32
    %35 = arith.cmpi ne, %34, %c0_i32_13 : i32
    scf.if %35 {
      %c0_25 = arith.constant 0 : index
      %c0_26 = arith.constant 0 : index
      %60 = vector.load %arg6[%c0_25, %c0_26] : memref<1x32xf32, #tpu.memory_space<vmem>>, vector<1x32xf32>
      tpu.vector_store %arg6[%c0_25, %c0_26], %27 {strides = array<i32>} : memref<1x32xf32, #tpu.memory_space<vmem>>, vector<1x32xf32>,
      %c0_27 = arith.constant 0 : index
      %c0_28 = arith.constant 0 : index
      %61 = vector.load %arg7[%c0_27, %c0_28] : memref<1x32xf32, #tpu.memory_space<vmem>>, vector<1x32xf32>
      tpu.vector_store %arg7[%c0_27, %c0_28], %30 {strides = array<i32>} : memref<1x32xf32, #tpu.memory_space<vmem>>, vector<1x32xf32>,
    } else {
    }
    %c0_i32_14 = arith.constant 0 : i32
    %36 = arith.cmpi ne, %arg0, %c0_i32_14 : i32
    %c0_i32_15 = arith.constant 0 : i32
    %37 = arith.cmpi ne, %arg1, %c0_i32_15 : i32
    %38 = arith.ori %36, %37 : i1
    %39 = arith.extui %38 : i1 to i32
    %c0_i32_16 = arith.constant 0 : i32
    %40 = arith.cmpi ne, %39, %c0_i32_16 : i32
    scf.if %40 {
      %c0_25 = arith.constant 0 : index
      %c0_26 = arith.constant 0 : index
      %60 = vector.load %arg6[%c0_25, %c0_26] : memref<1x32xf32, #tpu.memory_space<vmem>>, vector<1x32xf32>
      %61 = arith.addf %60, %27 : vector<1x32xf32>
      %c0_27 = arith.constant 0 : index
      %c0_28 = arith.constant 0 : index
      %62 = vector.load %arg6[%c0_27, %c0_28] : memref<1x32xf32, #tpu.memory_space<vmem>>, vector<1x32xf32>
      tpu.vector_store %arg6[%c0_27, %c0_28], %61 {strides = array<i32>} : memref<1x32xf32, #tpu.memory_space<vmem>>, vector<1x32xf32>,
      %c0_29 = arith.constant 0 : index
      %c0_30 = arith.constant 0 : index
      %63 = vector.load %arg7[%c0_29, %c0_30] : memref<1x32xf32, #tpu.memory_space<vmem>>, vector<1x32xf32>
      %64 = arith.addf %63, %30 : vector<1x32xf32>
      %c0_31 = arith.constant 0 : index
      %c0_32 = arith.constant 0 : index
      %65 = vector.load %arg7[%c0_31, %c0_32] : memref<1x32xf32, #tpu.memory_space<vmem>>, vector<1x32xf32>
      tpu.vector_store %arg7[%c0_31, %c0_32], %64 {strides = array<i32>} : memref<1x32xf32, #tpu.memory_space<vmem>>, vector<1x32xf32>,
    } else {
    }
    %41 = vector.shape_cast %25 : vector<64x32xf32> to vector<2x32x32xf32>
    %cst_17 = arith.constant 0xFF800000 : f32
    %42 = vector.shape_cast %17 : vector<1x32x1xi1> to vector<1x32x1xi1>
    %43 = vector.broadcast %42 : vector<1x32x1xi1> to vector<2x32x32xi1>
    %44 = vector.broadcast %cst_17 : f32 to vector<2x32x32xf32>
    %45 = arith.select %43, %41, %44 : vector<2x32x32xi1>, vector<2x32x32xf32>
    %cst_18 = arith.constant dense<0xFF800000> : vector<2x32xf32>
    %46 = vector.multi_reduction <maximumf>, %45, %cst_18 [1] : vector<2x32x32xf32> to vector<2x32xf32>
    %47 = vector.shape_cast %46 : vector<2x32xf32> to vector<1x2x32xf32>
    %cst_19 = arith.constant 0x7F800000 : f32
    %48 = vector.shape_cast %17 : vector<1x32x1xi1> to vector<1x32x1xi1>
    %49 = vector.broadcast %48 : vector<1x32x1xi1> to vector<2x32x32xi1>
    %50 = vector.broadcast %cst_19 : f32 to vector<2x32x32xf32>
    %51 = arith.select %49, %41, %50 : vector<2x32x32xi1>, vector<2x32x32xf32>
    %cst_20 = arith.constant dense<0x7F800000> : vector<2x32xf32>
    %52 = vector.multi_reduction <minimumf>, %51, %cst_20 [1] : vector<2x32x32xf32> to vector<2x32xf32>
    %53 = vector.shape_cast %52 : vector<2x32xf32> to vector<1x2x32xf32>
    %c0_i32_21 = arith.constant 0 : i32
    %54 = arith.cmpi eq, %arg1, %c0_i32_21 : i32
    %55 = arith.extui %54 : i1 to i32
    %c0_i32_22 = arith.constant 0 : i32
    %56 = arith.cmpi ne, %55, %c0_i32_22 : i32
    scf.if %56 {
      %c0_25 = arith.constant 0 : index
      %c0_26 = arith.constant 0 : index
      %c0_27 = arith.constant 0 : index
      %60 = vector.load %arg8[%c0_25, %c0_26, %c0_27] : memref<1x2x32xf32, #tpu.memory_space<vmem>>, vector<1x2x32xf32>
      tpu.vector_store %arg8[%c0_25, %c0_26, %c0_27], %47 {strides = array<i32>} : memref<1x2x32xf32, #tpu.memory_space<vmem>>, vector<1x2x32xf32>,
      %c0_28 = arith.constant 0 : index
      %c0_29 = arith.constant 0 : index
      %c0_30 = arith.constant 0 : index
      %61 = vector.load %arg9[%c0_28, %c0_29, %c0_30] : memref<1x2x32xf32, #tpu.memory_space<vmem>>, vector<1x2x32xf32>
      tpu.vector_store %arg9[%c0_28, %c0_29, %c0_30], %53 {strides = array<i32>} : memref<1x2x32xf32, #tpu.memory_space<vmem>>, vector<1x2x32xf32>,
    } else {
    }
    %c0_i32_23 = arith.constant 0 : i32
    %57 = arith.cmpi ne, %arg1, %c0_i32_23 : i32
    %58 = arith.extui %57 : i1 to i32
    %c0_i32_24 = arith.constant 0 : i32
    %59 = arith.cmpi ne, %58, %c0_i32_24 : i32
    scf.if %59 {
      %c0_25 = arith.constant 0 : index
      %c0_26 = arith.constant 0 : index
      %c0_27 = arith.constant 0 : index
      %60 = vector.load %arg8[%c0_25, %c0_26, %c0_27] : memref<1x2x32xf32, #tpu.memory_space<vmem>>, vector<1x2x32xf32>
      %61 = arith.maximumf %60, %47 : vector<1x2x32xf32>
      %c0_28 = arith.constant 0 : index
      %c0_29 = arith.constant 0 : index
      %c0_30 = arith.constant 0 : index
      %62 = vector.load %arg8[%c0_28, %c0_29, %c0_30] : memref<1x2x32xf32, #tpu.memory_space<vmem>>, vector<1x2x32xf32>
      tpu.vector_store %arg8[%c0_28, %c0_29, %c0_30], %61 {strides = array<i32>} : memref<1x2x32xf32, #tpu.memory_space<vmem>>, vector<1x2x32xf32>,
      %c0_31 = arith.constant 0 : index
      %c0_32 = arith.constant 0 : index
      %c0_33 = arith.constant 0 : index
      %63 = vector.load %arg9[%c0_31, %c0_32, %c0_33] : memref<1x2x32xf32, #tpu.memory_space<vmem>>, vector<1x2x32xf32>
      %64 = arith.minimumf %63, %53 : vector<1x2x32xf32>
      %c0_34 = arith.constant 0 : index
      %c0_35 = arith.constant 0 : index
      %c0_36 = arith.constant 0 : index
      %65 = vector.load %arg9[%c0_34, %c0_35, %c0_36] : memref<1x2x32xf32, #tpu.memory_space<vmem>>, vector<1x2x32xf32>
      tpu.vector_store %arg9[%c0_34, %c0_35, %c0_36], %64 {strides = array<i32>} : memref<1x2x32xf32, #tpu.memory_space<vmem>>, vector<1x2x32xf32>,
    } else {
    }
    return
  }
  func.func @transform_0(%arg0: i32, %arg1: i32) -> (i32, i32, i32) {
    %c0_i32 = arith.constant 0 : i32
    %c0_i32_0 = arith.constant 0 : i32
    return %arg0, %arg1, %c0_i32 : i32, i32, i32
  }
  func.func @transform_1(%arg0: i32, %arg1: i32) -> (i32, i32) {
    %c0_i32 = arith.constant 0 : i32
    %c0_i32_0 = arith.constant 0 : i32
    %c0_i32_1 = arith.constant 0 : i32
    return %c0_i32, %c0_i32_0 : i32, i32
  }
  func.func @transform_2(%arg0: i32, %arg1: i32) -> (i32, i32) {
    %c0_i32 = arith.constant 0 : i32
    %c0_i32_0 = arith.constant 0 : i32
    %c0_i32_1 = arith.constant 0 : i32
    return %c0_i32, %c0_i32_0 : i32, i32
  }
  func.func @transform_3(%arg0: i32, %arg1: i32) -> (i32, i32) {
    %c0_i32 = arith.constant 0 : i32
    %c0_i32_0 = arith.constant 0 : i32
    %c0_i32_1 = arith.constant 0 : i32
    return %c0_i32, %c0_i32_0 : i32, i32
  }
  func.func @transform_4(%arg0: i32, %arg1: i32) -> (i32, i32) {
    %c0_i32 = arith.constant 0 : i32
    %c0_i32_0 = arith.constant 0 : i32
    %c0_i32_1 = arith.constant 0 : i32
    return %c0_i32, %c0_i32_0 : i32, i32
  }
  func.func @transform_5(%arg0: i32, %arg1: i32) -> (i32, i32) {
    %c0_i32 = arith.constant 0 : i32
    %c0_i32_0 = arith.constant 0 : i32
    %c0_i32_1 = arith.constant 0 : i32
    return %c0_i32, %c0_i32_0 : i32, i32
  }
  func.func @transform_6(%arg0: i32, %arg1: i32) -> (i32, i32, i32) {
    %c0_i32 = arith.constant 0 : i32
    %c0_i32_0 = arith.constant 0 : i32
    %c0_i32_1 = arith.constant 0 : i32
    return %arg0, %c0_i32, %c0_i32_0 : i32, i32, i32
  }
  func.func @transform_7(%arg0: i32, %arg1: i32) -> (i32, i32, i32) {
    %c0_i32 = arith.constant 0 : i32
    %c0_i32_0 = arith.constant 0 : i32
    %c0_i32_1 = arith.constant 0 : i32
    return %arg0, %c0_i32, %c0_i32_0 : i32, i32, i32
  }
}

module attributes {stable_mosaic.version = 11 : i64} {
  func.func @_projector_kernel(%arg0: memref<2x32xf32, #tpu.memory_space<vmem>>, %arg1: memref<32x64xbf16, #tpu.memory_space<vmem>>, %arg2: memref<1x64xf32, #tpu.memory_space<vmem>>, %arg3: memref<1x64xf32, #tpu.memory_space<vmem>>, %arg4: memref<64x16xbf16, #tpu.memory_space<vmem>>, %arg5: memref<2x16xf32, #tpu.memory_space<vmem>>) attributes {dimension_semantics = [], scalar_prefetch = 0 : i64, scratch_operands = 0 : i64, tpu.core_type = #tpu.core_type<tc>} {
    %c0 = arith.constant 0 : index
    %c0_0 = arith.constant 0 : index
    %0 = vector.load %arg0[%c0, %c0_0] : memref<2x32xf32, #tpu.memory_space<vmem>>, vector<2x32xf32>
    %1 = arith.truncf %0 : vector<2x32xf32> to vector<2x32xbf16>
    %c0_1 = arith.constant 0 : index
    %c0_2 = arith.constant 0 : index
    %2 = vector.load %arg1[%c0_1, %c0_2] : memref<32x64xbf16, #tpu.memory_space<vmem>>, vector<32x64xbf16>
    %cst = arith.constant dense<0.000000e+00> : vector<2x64xf32>
    %3 = tpu.matmul %1, %2, %cst {dimension_numbers = #tpu.dot_dimension_numbers<[1], [0], [0], [1], [0, 0, 1, 1], [], []>} : vector<2x32xbf16>, vector<32x64xbf16>, vector<2x64xf32> -> vector<2x64xf32>
    %cst_3 = arith.constant dense<0.000000e+00> : vector<64xf32>
    %4 = vector.multi_reduction <add>, %3, %cst_3 [0] : vector<2x64xf32> to vector<64xf32>
    %5 = vector.shape_cast %4 : vector<64xf32> to vector<1x64xf32>
    %cst_4 = arith.constant 2.000000e+00 : f32
    %6 = vector.broadcast %cst_4 : f32 to vector<1x64xf32>
    %7 = arith.divf %5, %6 : vector<1x64xf32>
    %8 = vector.broadcast %7 : vector<1x64xf32> to vector<2x64xf32>
    %9 = arith.subf %3, %8 : vector<2x64xf32>
    %10 = arith.mulf %9, %9 : vector<2x64xf32>
    %cst_5 = arith.constant dense<0.000000e+00> : vector<64xf32>
    %11 = vector.multi_reduction <add>, %10, %cst_5 [0] : vector<2x64xf32> to vector<64xf32>
    %12 = vector.shape_cast %11 : vector<64xf32> to vector<1x64xf32>
    %cst_6 = arith.constant 2.000000e+00 : f32
    %13 = vector.broadcast %cst_6 : f32 to vector<1x64xf32>
    %14 = arith.divf %12, %13 : vector<1x64xf32>
    %c0_7 = arith.constant 0 : index
    %c0_8 = arith.constant 0 : index
    %15 = vector.load %arg2[%c0_7, %c0_8] : memref<1x64xf32, #tpu.memory_space<vmem>>, vector<1x64xf32>
    %cst_9 = arith.constant 9.99999974E-6 : f32
    %16 = vector.broadcast %cst_9 : f32 to vector<1x64xf32>
    %17 = arith.addf %14, %16 : vector<1x64xf32>
    %18 = math.rsqrt %17 : vector<1x64xf32>
    %19 = arith.mulf %15, %18 : vector<1x64xf32>
    %20 = vector.broadcast %19 : vector<1x64xf32> to vector<2x64xf32>
    %21 = arith.mulf %9, %20 : vector<2x64xf32>
    %c0_10 = arith.constant 0 : index
    %c0_11 = arith.constant 0 : index
    %22 = vector.load %arg3[%c0_10, %c0_11] : memref<1x64xf32, #tpu.memory_space<vmem>>, vector<1x64xf32>
    %23 = vector.broadcast %22 : vector<1x64xf32> to vector<2x64xf32>
    %24 = arith.addf %21, %23 : vector<2x64xf32>
    %cst_12 = arith.constant 0.000000e+00 : f32
    %25 = vector.broadcast %cst_12 : f32 to vector<2x64xf32>
    %26 = arith.maximumf %24, %25 : vector<2x64xf32>
    %27 = arith.truncf %26 : vector<2x64xf32> to vector<2x64xbf16>
    %c0_13 = arith.constant 0 : index
    %c0_14 = arith.constant 0 : index
    %28 = vector.load %arg4[%c0_13, %c0_14] : memref<64x16xbf16, #tpu.memory_space<vmem>>, vector<64x16xbf16>
    %cst_15 = arith.constant dense<0.000000e+00> : vector<2x16xf32>
    %29 = tpu.matmul %27, %28, %cst_15 {dimension_numbers = #tpu.dot_dimension_numbers<[1], [0], [0], [1], [0, 0, 1, 1], [], []>} : vector<2x64xbf16>, vector<64x16xbf16>, vector<2x16xf32> -> vector<2x16xf32>
    %c0_16 = arith.constant 0 : index
    %c0_17 = arith.constant 0 : index
    %30 = vector.load %arg5[%c0_16, %c0_17] : memref<2x16xf32, #tpu.memory_space<vmem>>, vector<2x16xf32>
    tpu.vector_store %arg5[%c0_16, %c0_17], %29 {strides = array<i32>} : memref<2x16xf32, #tpu.memory_space<vmem>>, vector<2x16xf32>,
    return
  }
}

</mosaic_0001>

<llo_original>
// kernel: simclr_pointnet_forward.9
$region0: #{simclr_pointnet_forward.9}
  #allocation0 [shape = 'u32[]', space=smem, size = 0x4, offset = 0x4, fixed_abs, tag = 'smem constant byte address 0x4 - core index']
  #allocation1 [shape = 'u32[144,128]{1,0:T(1,128)}', space=vmem, size = 0x12000, scoped, tag = 'internal scratch']
  %s0 = inlined_call_operand.vmem [shape: bf16[2,32,64], index: 0, kind: input, shape index: {}]
  %s1 = inlined_call_operand.vmem [shape: f32[1,64], index: 1, kind: input, shape index: {}]
  %s2 = inlined_call_operand.vmem [shape: f32[1,64], index: 2, kind: input, shape index: {}]
  %s3 = inlined_call_operand.vmem [shape: bf16[64,128], index: 3, kind: input, shape index: {}]
  %s4 = inlined_call_operand.vmem [shape: bf16[2,32,128], index: 4, kind: output, shape index: {0}]
  %s5 = inlined_call_operand.vmem [shape: f32[1,128], index: 5, kind: output, shape index: {1}]
  %s6 = inlined_call_operand.vmem [shape: f32[1,128], index: 6, kind: output, shape index: {2}]
  %7 = xla_tuple %s4, %s5, %s6
  %s8 = sld [smem:[#allocation0]]
  $region50: #{simclr_pointnet_forward.9} parent=0
    _
  %s10 = ssub.s32 1, %s8
  %s11 = scalar_select 0, %s10, %s8
  // Predicated region
  $region2: #{simclr_pointnet_forward.9} parent=0 // pred_check
    _
  $region3: #{simclr_pointnet_forward.9} parent=0 // pred_check_branch
    %13 = sbr.rel (0) target = $region5
  $region4: #{simclr_pointnet_forward.9} parent=0 // pred_region
    _
  $region5: #{simclr_pointnet_forward.9} parent=0 // pred_fallthru
    _
  // Predicated region
  $region6: #{simclr_pointnet_forward.9} parent=0 // pred_check
    _
  $region7: #{simclr_pointnet_forward.9} parent=0 // pred_check_branch
    %15 = sbr.rel (0) target = $region9
  $region8: #{simclr_pointnet_forward.9} parent=0 // pred_region
    _
  $region9: #{simclr_pointnet_forward.9} parent=0 // pred_fallthru
    _
  // Predicated region
  $region10: #{simclr_pointnet_forward.9} parent=0 // pred_check
    _
  $region11: #{simclr_pointnet_forward.9} parent=0 // pred_check_branch
    %17 = sbr.rel (0) target = $region13
  $region12: #{simclr_pointnet_forward.9} parent=0 // pred_region
    _
  $region13: #{simclr_pointnet_forward.9} parent=0 // pred_fallthru
    _
  // Predicated region
  $region14: #{simclr_pointnet_forward.9} parent=0 // pred_check
    _
  $region15: #{simclr_pointnet_forward.9} parent=0 // pred_check_branch
    %19 = sbr.rel (0) target = $region17
  $region16: #{simclr_pointnet_forward.9} parent=0 // pred_region
    _
  $region17: #{simclr_pointnet_forward.9} parent=0 // pred_fallthru
    _
  %v21 = vld [vmem:[%s0] sm:$0xf]
  %v22 = vld [vmem:[%s0 + $0x4] sm:$0xf]
  %v23 = vld [vmem:[%s0 + $0x8] sm:$0xf]
  %v24 = vld [vmem:[%s0 + $0xc] sm:$0xf]
  %v25 = vld [vmem:[%s0 + $0x10] sm:$0xf]
  %v26 = vld [vmem:[%s0 + $0x14] sm:$0xf]
  %v27 = vld [vmem:[%s0 + $0x18] sm:$0xf]
  %v28 = vld [vmem:[%s0 + $0x1c] sm:$0xf]
  %v29 = vunpack.c.l.bf16 %v21
  %v30 = vunpack.c.l.bf16 %v22
  %v31 = vunpack.c.l.bf16 %v23
  %v32 = vunpack.c.l.bf16 %v24
  %v33 = vunpack.c.l.bf16 %v25
  %v34 = vunpack.c.l.bf16 %v26
  %v35 = vunpack.c.l.bf16 %v27
  %v36 = vunpack.c.l.bf16 %v28
  %v37 = vld [vmem:[%s1] sm:$0x1]
  %v39 = vlaneseq
  %v40 = vshrl.u32 %v39, 7
  %v41 = vsub.s32 0, %v40
  %v42 = vrot.slane %v37, %v41
  %v44 = vmul.f32 %v29, %v42
  %v45 = vmul.f32 %v30, %v42
  %v46 = vmul.f32 %v31, %v42
  %v47 = vmul.f32 %v32, %v42
  %v48 = vmul.f32 %v33, %v42
  %v49 = vmul.f32 %v34, %v42
  %v50 = vmul.f32 %v35, %v42
  %v51 = vmul.f32 %v36, %v42
  %v52 = vld [vmem:[%s2] sm:$0x1]
  %v54 = vlaneseq
  %v55 = vshrl.u32 %v54, 7
  %v56 = vsub.s32 0, %v55
  %v57 = vrot.slane %v52, %v56
  %v59 = vadd.f32 %v44, %v57
  %v60 = vadd.f32 %v45, %v57
  %v61 = vadd.f32 %v46, %v57
  %v62 = vadd.f32 %v47, %v57
  %v63 = vadd.f32 %v48, %v57
  %v64 = vadd.f32 %v49, %v57
  %v65 = vadd.f32 %v50, %v57
  %v66 = vadd.f32 %v51, %v57
  %v67 = vmax.f32 %v59, 0.0
  %v68 = vmax.f32 %v60, 0.0
  %v69 = vmax.f32 %v61, 0.0
  %v70 = vmax.f32 %v62, 0.0
  %v71 = vmax.f32 %v63, 0.0
  %v72 = vmax.f32 %v64, 0.0
  %v73 = vmax.f32 %v65, 0.0
  %v74 = vmax.f32 %v66, 0.0
  %s75 = smul.u32 0, 32
  %v76 = vlaneseq
  %v77 = vshrl.u32 %v76, 7
  %v78 = vadd.s32 %v77, 8
  %v79 = vadd.s32 %v77, 16
  %v80 = vadd.s32 %v77, 24
  %v81 = vstv %s75
  %v82 = vadd.s32 %v81, %v77
  %v83 = vadd.s32 %v81, %v78
  %v84 = vadd.s32 %v81, %v79
  %v85 = vadd.s32 %v81, %v80
  %vm86 = vcmp.lt.s32.totalorder %v82, 20
  %vm87 = vcmp.lt.s32.totalorder %v83, 20
  %vm88 = vcmp.lt.s32.totalorder %v84, 20
  %vm89 = vcmp.lt.s32.totalorder %v85, 20
  %v90 = vsel %vm86, 1, 0
  %v91 = vsel %vm87, 1, 0
  %v92 = vsel %vm88, 1, 0
  %v93 = vsel %vm89, 1, 0
  %vm94 = vcmp.eq.s32.totalorder %v90, 1
  %vm95 = vcmp.eq.s32.totalorder %v91, 1
  %vm96 = vcmp.eq.s32.totalorder %v92, 1
  %vm97 = vcmp.eq.s32.totalorder %v93, 1
  %v98 = vsel %vm94, %v67, 0.0
  %v99 = vsel %vm95, %v68, 0.0
  %v100 = vsel %vm96, %v69, 0.0
  %v101 = vsel %vm97, %v70, 0.0
  %v102 = vsel %vm94, %v71, 0.0
  %v103 = vsel %vm95, %v72, 0.0
  %v104 = vsel %vm96, %v73, 0.0
  %v105 = vsel %vm97, %v74, 0.0
  %v106 = vpack.c.bf16 %v99, %v98
  %v107 = vpack.c.bf16 %v101, %v100
  %v108 = vpack.c.bf16 %v103, %v102
  %v109 = vpack.c.bf16 %v105, %v104
  %v110 = vld [vmem:[%s3] sm:$0xf]
  %v111 = vld [vmem:[%s3 + $0x4] sm:$0xf]
  %v112 = vld [vmem:[%s3 + $0x8] sm:$0xf]
  %v113 = vld [vmem:[%s3 + $0xc] sm:$0xf]
  %v114 = vld [vmem:[%s3 + $0x10] sm:$0xf]
  %v115 = vld [vmem:[%s3 + $0x14] sm:$0xf]
  %v116 = vld [vmem:[%s3 + $0x18] sm:$0xf]
  %v117 = vld [vmem:[%s3 + $0x1c] sm:$0xf]
  %v126 = vunpack.c.l.b16 %v110
  %v127 = vunpack.c.l.b16 %v111
  %v128 = vunpack.c.l.b16 %v112
  %v129 = vunpack.c.l.b16 %v113
  %v130 = vunpack.c.l.b16 %v114
  %v131 = vunpack.c.l.b16 %v115
  %v132 = vunpack.c.l.b16 %v116
  %v133 = vunpack.c.l.b16 %v117
  %v134 = vpack.c.b16 %v127, %v126
  %v135 = vpack.c.b16 %v129, %v128
  %v136 = vpack.c.b16 %v131, %v130
  %v137 = vpack.c.b16 %v133, %v132
  %vm142 = vcmask 523264
  %v144 = vsel %vm142, %v106, 0
  %v147 = vsel %vm142, %v107, 0
  %v150 = vsel %vm142, %v108, 0
  %v153 = vsel %vm142, %v109, 0
  %155 = vmatprep.subr.bf16.mxu0 0
  %156 = vmatpush1.bf16.msra.mxu0 %v134
  %157 = vmatprep.subr.bf16.mxu0 0
  %158 = vmatpush1.bf16.msra.mxu0 %v135
  %159 = vmatprep.subr.bf16.mxu0 0
  %160 = vmatpush1.bf16.msra.mxu0 %v136
  %161 = vmatprep.subr.bf16.mxu0 0
  %162 = vmatpush1.bf16.msra.mxu0 %v137
  %163 = vmatprep.subr.bf16.mxu0 0
  %164 = vmatpush1.bf16.msra.mxu0 0
  %165 = vmatprep.subr.bf16.mxu0 0
  %166 = vmatpush1.bf16.msra.mxu0 0
  %167 = vmatprep.subr.bf16.mxu0 0
  %168 = vmatpush1.bf16.msra.mxu0 0
  %169 = vmatprep.subr.bf16.mxu0 0
  %170 = vmatpush1.bf16.msra.mxu0 0
  %171 = vmatprep.subr.bf16.mxu0 0
  %172 = vmatpush1.bf16.msra.mxu0 0
  %173 = vmatprep.subr.bf16.mxu0 0
  %174 = vmatpush1.bf16.msra.mxu0 0
  %175 = vmatprep.subr.bf16.mxu0 0
  %176 = vmatpush1.bf16.msra.mxu0 0
  %177 = vmatprep.subr.bf16.mxu0 0
  %178 = vmatpush1.bf16.msra.mxu0 0
  %179 = vmatprep.subr.bf16.mxu0 0
  %180 = vmatpush1.bf16.msra.mxu0 0
  %181 = vmatprep.subr.bf16.mxu0 0
  %182 = vmatpush1.bf16.msra.mxu0 0
  %183 = vmatprep.subr.bf16.mxu0 0
  %184 = vmatpush1.bf16.msra.mxu0 0
  %185 = vmatprep.subr.bf16.mxu0 0
  %186 = vmatpush1.bf16.msra.mxu0 0
  %187 = vmatprep.mubr.bf16.mxu0 0
  %188 = vmatmul.mubr.bf16.gmra.mrb[0].mxu0 %v144
  %v189 = vpop.f32.mrb[0].mxu0
  %v190 = vadd.f32 0.0, %v189
  %v191 = vpop.f32.mrb[0].mxu0
  %v192 = vpop.f32.mrb[0].mxu0
  %v193 = vadd.f32 0.0, %v192
  %v194 = vpop.f32.mrb[0].mxu0
  %195 = vmatprep.mubr.bf16.mxu0 0
  %196 = vmatmul.mubr.bf16.gmra.mrb[0].mxu0 %v147
  %v197 = vpop.f32.mrb[0].mxu0
  %v198 = vadd.f32 0.0, %v197
  %v199 = vpop.f32.mrb[0].mxu0
  %v200 = vpop.f32.mrb[0].mxu0
  %v201 = vadd.f32 0.0, %v200
  %v202 = vpop.f32.mrb[0].mxu0
  %203 = vmatprep.mubr.bf16.mxu0 0
  %204 = vmatmul.mubr.bf16.gmra.mrb[0].mxu0 %v150
  %v205 = vpop.f32.mrb[0].mxu0
  %v206 = vadd.f32 0.0, %v205
  %v207 = vpop.f32.mrb[0].mxu0
  %v208 = vpop.f32.mrb[0].mxu0
  %v209 = vadd.f32 0.0, %v208
  %v210 = vpop.f32.mrb[0].mxu0
  %211 = vmatprep.mubr.bf16.mxu0 0
  %212 = vmatmul.mubr.bf16.gmra.mrb[0].mxu0 %v153
  %v213 = vpop.f32.mrb[0].mxu0
  %v214 = vadd.f32 0.0, %v213
  %v215 = vpop.f32.mrb[0].mxu0
  %v216 = vpop.f32.mrb[0].mxu0
  %v217 = vadd.f32 0.0, %v216
  %v218 = vpop.f32.mrb[0].mxu0
  %219 = vdwg.mxu0
  %v220 = vadd.f32 %v190, %v193
  %v221 = vadd.f32 %v220, %v198
  %v222 = vadd.f32 %v221, %v201
  %v223 = vadd.f32 %v222, %v206
  %v224 = vadd.f32 %v223, %v209
  %v225 = vadd.f32 %v224, %v214
  %v226 = vadd.f32 %v225, %v217
  %v227 = vrot.slane %v226, 4
  %v228 = vadd.f32 %v226, %v227
  %v229 = vrot.slane %v228, 2
  %v230 = vadd.f32 %v228, %v229
  %v231 = vrot.slane %v230, 1
  %v232 = vadd.f32 %v230, %v231
  %v233 = vmul.f32 %v190, %v190
  %v234 = vmul.f32 %v193, %v193
  %v235 = vmul.f32 %v198, %v198
  %v236 = vmul.f32 %v201, %v201
  %v237 = vmul.f32 %v206, %v206
  %v238 = vmul.f32 %v209, %v209
  %v239 = vmul.f32 %v214, %v214
  %v240 = vmul.f32 %v217, %v217
  %v241 = vadd.f32 %v233, %v234
  %v242 = vadd.f32 %v241, %v235
  %v243 = vadd.f32 %v242, %v236
  %v244 = vadd.f32 %v243, %v237
  %v245 = vadd.f32 %v244, %v238
  %v246 = vadd.f32 %v245, %v239
  %v247 = vadd.f32 %v246, %v240
  %v248 = vrot.slane %v247, 4
  %v249 = vadd.f32 %v247, %v248
  %v250 = vrot.slane %v249, 2
  %v251 = vadd.f32 %v249, %v250
  %v252 = vrot.slane %v251, 1
  %v253 = vadd.f32 %v251, %v252
  %p254 = scmp.eq.s32.totalorder 0, 0
  %p255 = scmp.eq.s32.totalorder 0, 0
  %p256 = pnand %p254, %p255
  %p257 = pneg %p256
  // Predicated region
  $region18: #{simclr_pointnet_forward.9} parent=0 // pred_check
    _
  $region19: #{simclr_pointnet_forward.9} parent=0 // pred_check_branch
    %259 = sbr.rel (%p256) target = $region21
  $region20: #{simclr_pointnet_forward.9} parent=0 // pred_region
    %260 = vst [vmem:[%s5] sm:$0x1] %v232
    %261 = vst [vmem:[%s6] sm:$0x1] %v253
  $region21: #{simclr_pointnet_forward.9} parent=0 // pred_fallthru
    _
  %p262 = scmp.ne.s32.totalorder 0, 0
  %p263 = scmp.ne.s32.totalorder 0, 0
  %p264 = por %p262, %p263
  // Predicated region
  $region22: #{simclr_pointnet_forward.9} parent=0 // pred_check
    %p265 = pneg %p264
  $region23: #{simclr_pointnet_forward.9} parent=0 // pred_check_branch
    %267 = sbr.rel (%p265) target = $region25
  $region24: #{simclr_pointnet_forward.9} parent=0 // pred_region
    %v268 = vld [vmem:[%s5] sm:$0x1]
    %v269 = vadd.f32 %v268, %v232
    %270 = vst [vmem:[%s5] sm:$0x1] %v269
    %v271 = vld [vmem:[%s6] sm:$0x1]
    %v272 = vadd.f32 %v271, %v253
    %273 = vst [vmem:[%s6] sm:$0x1] %v272
  $region25: #{simclr_pointnet_forward.9} parent=0 // pred_fallthru
    _
  %v274 = vpack.c.bf16 %v193, %v190
  %v275 = vpack.c.bf16 %v201, %v198
  %v276 = vpack.c.bf16 %v209, %v206
  %v277 = vpack.c.bf16 %v217, %v214
  %v282 = vunpack.c.l.b16 %v274
  %v283 = vunpack.c.h.b16 %v274
  %v284 = vunpack.c.l.b16 %v275
  %v285 = vunpack.c.h.b16 %v275
  %v286 = vunpack.c.l.b16 %v276
  %v287 = vunpack.c.h.b16 %v276
  %v288 = vunpack.c.l.b16 %v277
  %v289 = vunpack.c.h.b16 %v277
  %v290 = vpack.c.b16 %v282, %v282
  %v291 = vpack.c.b16 %v283, %v283
  %v292 = vpack.c.b16 %v284, %v284
  %v293 = vpack.c.b16 %v285, %v285
  %v294 = vpack.c.b16 %v286, %v286
  %v295 = vpack.c.b16 %v287, %v287
  %v296 = vpack.c.b16 %v288, %v288
  %v297 = vpack.c.b16 %v289, %v289
  %306 = vst [vmem:[%s4] sm:$0xf] %v290
  %307 = vst [vmem:[%s4 + $0x4] sm:$0xf] %v291
  %308 = vst [vmem:[%s4 + $0x8] sm:$0xf] %v292
  %309 = vst [vmem:[%s4 + $0xc] sm:$0xf] %v293
  %310 = vst [vmem:[%s4 + $0x10] sm:$0xf] %v294
  %311 = vst [vmem:[%s4 + $0x14] sm:$0xf] %v295
  %312 = vst [vmem:[%s4 + $0x18] sm:$0xf] %v296
  %313 = vst [vmem:[%s4 + $0x1c] sm:$0xf] %v297
  // Predicated region
  $region26: #{simclr_pointnet_forward.9} parent=0 // pred_check
    _
  $region27: #{simclr_pointnet_forward.9} parent=0 // pred_check_branch
    %315 = sbr.rel (0) target = $region29
  $region28: #{simclr_pointnet_forward.9} parent=0 // pred_region
    _
  $region29: #{simclr_pointnet_forward.9} parent=0 // pred_fallthru
    _
  // Predicated region
  $region30: #{simclr_pointnet_forward.9} parent=0 // pred_check
    _
  $region31: #{simclr_pointnet_forward.9} parent=0 // pred_check_branch
    %317 = sbr.rel (0) target = $region33
  $region32: #{simclr_pointnet_forward.9} parent=0 // pred_region
    _
  $region33: #{simclr_pointnet_forward.9} parent=0 // pred_fallthru
    _
  // Predicated region
  $region34: #{simclr_pointnet_forward.9} parent=0 // pred_check
    _
  $region35: #{simclr_pointnet_forward.9} parent=0 // pred_check_branch
    %319 = sbr.rel (0) target = $region37
  $region36: #{simclr_pointnet_forward.9} parent=0 // pred_region
    _
  $region37: #{simclr_pointnet_forward.9} parent=0 // pred_fallthru
    _
  // Predicated region
  $region38: #{simclr_pointnet_forward.9} parent=0 // pred_check
    _
  $region39: #{simclr_pointnet_forward.9} parent=0 // pred_check_branch
    %321 = sbr.rel (0) target = $region41
  $region40: #{simclr_pointnet_forward.9} parent=0 // pred_region
    _
  $region41: #{simclr_pointnet_forward.9} parent=0 // pred_fallthru
    _
  // Predicated region
  $region42: #{simclr_pointnet_forward.9} parent=0 // pred_check
    _
  $region43: #{simclr_pointnet_forward.9} parent=0 // pred_check_branch
    %323 = sbr.rel (0) target = $region45
  $region44: #{simclr_pointnet_forward.9} parent=0 // pred_region
    _
  $region45: #{simclr_pointnet_forward.9} parent=0 // pred_fallthru
    _
  // Predicated region
  $region46: #{simclr_pointnet_forward.9} parent=0 // pred_check
    _
  $region47: #{simclr_pointnet_forward.9} parent=0 // pred_check_branch
    %325 = sbr.rel (0) target = $region49
  $region48: #{simclr_pointnet_forward.9} parent=0 // pred_region
    _
  $region49: #{simclr_pointnet_forward.9} parent=0 // pred_fallthru
    _

// kernel: simclr_pointnet_forward.7
$region0: #{simclr_pointnet_forward.7}
  #allocation0 [shape = 'u32[]', space=smem, size = 0x4, offset = 0x4, fixed_abs, tag = 'smem constant byte address 0x4 - core index']
  #allocation1 [shape = 'u32[144,128]{1,0:T(1,128)}', space=vmem, size = 0x12000, scoped, tag = 'internal scratch']
  %s0 = inlined_call_operand.vmem [shape: bf16[2,32,64], index: 0, kind: input, shape index: {}]
  %s1 = inlined_call_operand.vmem [shape: f32[1,64], index: 1, kind: input, shape index: {}]
  %s2 = inlined_call_operand.vmem [shape: f32[1,64], index: 2, kind: input, shape index: {}]
  %s3 = inlined_call_operand.vmem [shape: bf16[64,64], index: 3, kind: input, shape index: {}]
  %s4 = inlined_call_operand.vmem [shape: bf16[2,32,64], index: 4, kind: output, shape index: {0}]
  %s5 = inlined_call_operand.vmem [shape: f32[1,64], index: 5, kind: output, shape index: {1}]
  %s6 = inlined_call_operand.vmem [shape: f32[1,64], index: 6, kind: output, shape index: {2}]
  %7 = xla_tuple %s4, %s5, %s6
  %s8 = sld [smem:[#allocation0]]
  $region50: #{simclr_pointnet_forward.7} parent=0
    _
  %s10 = ssub.s32 1, %s8
  %s11 = scalar_select 0, %s10, %s8
  // Predicated region
  $region2: #{simclr_pointnet_forward.7} parent=0 // pred_check
    _
  $region3: #{simclr_pointnet_forward.7} parent=0 // pred_check_branch
    %13 = sbr.rel (0) target = $region5
  $region4: #{simclr_pointnet_forward.7} parent=0 // pred_region
    _
  $region5: #{simclr_pointnet_forward.7} parent=0 // pred_fallthru
    _
  // Predicated region
  $region6: #{simclr_pointnet_forward.7} parent=0 // pred_check
    _
  $region7: #{simclr_pointnet_forward.7} parent=0 // pred_check_branch
    %15 = sbr.rel (0) target = $region9
  $region8: #{simclr_pointnet_forward.7} parent=0 // pred_region
    _
  $region9: #{simclr_pointnet_forward.7} parent=0 // pred_fallthru
    _
  // Predicated region
  $region10: #{simclr_pointnet_forward.7} parent=0 // pred_check
    _
  $region11: #{simclr_pointnet_forward.7} parent=0 // pred_check_branch
    %17 = sbr.rel (0) target = $region13
  $region12: #{simclr_pointnet_forward.7} parent=0 // pred_region
    _
  $region13: #{simclr_pointnet_forward.7} parent=0 // pred_fallthru
    _
  // Predicated region
  $region14: #{simclr_pointnet_forward.7} parent=0 // pred_check
    _
  $region15: #{simclr_pointnet_forward.7} parent=0 // pred_check_branch
    %19 = sbr.rel (0) target = $region17
  $region16: #{simclr_pointnet_forward.7} parent=0 // pred_region
    _
  $region17: #{simclr_pointnet_forward.7} parent=0 // pred_fallthru
    _
  %v21 = vld [vmem:[%s0] sm:$0xf]
  %v22 = vld [vmem:[%s0 + $0x4] sm:$0xf]
  %v23 = vld [vmem:[%s0 + $0x8] sm:$0xf]
  %v24 = vld [vmem:[%s0 + $0xc] sm:$0xf]
  %v25 = vld [vmem:[%s0 + $0x10] sm:$0xf]
  %v26 = vld [vmem:[%s0 + $0x14] sm:$0xf]
  %v27 = vld [vmem:[%s0 + $0x18] sm:$0xf]
  %v28 = vld [vmem:[%s0 + $0x1c] sm:$0xf]
  %v29 = vunpack.c.l.bf16 %v21
  %v30 = vunpack.c.l.bf16 %v22
  %v31 = vunpack.c.l.bf16 %v23
  %v32 = vunpack.c.l.bf16 %v24
  %v33 = vunpack.c.l.bf16 %v25
  %v34 = vunpack.c.l.bf16 %v26
  %v35 = vunpack.c.l.bf16 %v27
  %v36 = vunpack.c.l.bf16 %v28
  %v37 = vld [vmem:[%s1] sm:$0x1]
  %v39 = vlaneseq
  %v40 = vshrl.u32 %v39, 7
  %v41 = vsub.s32 0, %v40
  %v42 = vrot.slane %v37, %v41
  %v44 = vmul.f32 %v29, %v42
  %v45 = vmul.f32 %v30, %v42
  %v46 = vmul.f32 %v31, %v42
  %v47 = vmul.f32 %v32, %v42
  %v48 = vmul.f32 %v33, %v42
  %v49 = vmul.f32 %v34, %v42
  %v50 = vmul.f32 %v35, %v42
  %v51 = vmul.f32 %v36, %v42
  %v52 = vld [vmem:[%s2] sm:$0x1]
  %v54 = vlaneseq
  %v55 = vshrl.u32 %v54, 7
  %v56 = vsub.s32 0, %v55
  %v57 = vrot.slane %v52, %v56
  %v59 = vadd.f32 %v44, %v57
  %v60 = vadd.f32 %v45, %v57
  %v61 = vadd.f32 %v46, %v57
  %v62 = vadd.f32 %v47, %v57
  %v63 = vadd.f32 %v48, %v57
  %v64 = vadd.f32 %v49, %v57
  %v65 = vadd.f32 %v50, %v57
  %v66 = vadd.f32 %v51, %v57
  %v67 = vmax.f32 %v59, 0.0
  %v68 = vmax.f32 %v60, 0.0
  %v69 = vmax.f32 %v61, 0.0
  %v70 = vmax.f32 %v62, 0.0
  %v71 = vmax.f32 %v63, 0.0
  %v72 = vmax.f32 %v64, 0.0
  %v73 = vmax.f32 %v65, 0.0
  %v74 = vmax.f32 %v66, 0.0
  %s75 = smul.u32 0, 32
  %v76 = vlaneseq
  %v77 = vshrl.u32 %v76, 7
  %v78 = vadd.s32 %v77, 8
  %v79 = vadd.s32 %v77, 16
  %v80 = vadd.s32 %v77, 24
  %v81 = vstv %s75
  %v82 = vadd.s32 %v81, %v77
  %v83 = vadd.s32 %v81, %v78
  %v84 = vadd.s32 %v81, %v79
  %v85 = vadd.s32 %v81, %v80
  %vm86 = vcmp.lt.s32.totalorder %v82, 20
  %vm87 = vcmp.lt.s32.totalorder %v83, 20
  %vm88 = vcmp.lt.s32.totalorder %v84, 20
  %vm89 = vcmp.lt.s32.totalorder %v85, 20
  %v90 = vsel %vm86, 1, 0
  %v91 = vsel %vm87, 1, 0
  %v92 = vsel %vm88, 1, 0
  %v93 = vsel %vm89, 1, 0
  %vm94 = vcmp.eq.s32.totalorder %v90, 1
  %vm95 = vcmp.eq.s32.totalorder %v91, 1
  %vm96 = vcmp.eq.s32.totalorder %v92, 1
  %vm97 = vcmp.eq.s32.totalorder %v93, 1
  %v98 = vsel %vm94, %v67, 0.0
  %v99 = vsel %vm95, %v68, 0.0
  %v100 = vsel %vm96, %v69, 0.0
  %v101 = vsel %vm97, %v70, 0.0
  %v102 = vsel %vm94, %v71, 0.0
  %v103 = vsel %vm95, %v72, 0.0
  %v104 = vsel %vm96, %v73, 0.0
  %v105 = vsel %vm97, %v74, 0.0
  %v106 = vpack.c.bf16 %v99, %v98
  %v107 = vpack.c.bf16 %v101, %v100
  %v108 = vpack.c.bf16 %v103, %v102
  %v109 = vpack.c.bf16 %v105, %v104
  %v110 = vld [vmem:[%s3] sm:$0xf]
  %v111 = vld [vmem:[%s3 + $0x4] sm:$0xf]
  %v112 = vld [vmem:[%s3 + $0x8] sm:$0xf]
  %v113 = vld [vmem:[%s3 + $0xc] sm:$0xf]
  %v114 = vld [vmem:[%s3 + $0x10] sm:$0xf]
  %v115 = vld [vmem:[%s3 + $0x14] sm:$0xf]
  %v116 = vld [vmem:[%s3 + $0x18] sm:$0xf]
  %v117 = vld [vmem:[%s3 + $0x1c] sm:$0xf]
  %v126 = vunpack.c.l.b16 %v110
  %v127 = vunpack.c.l.b16 %v111
  %v128 = vunpack.c.l.b16 %v112
  %v129 = vunpack.c.l.b16 %v113
  %v130 = vunpack.c.l.b16 %v114
  %v131 = vunpack.c.l.b16 %v115
  %v132 = vunpack.c.l.b16 %v116
  %v133 = vunpack.c.l.b16 %v117
  %v134 = vpack.c.b16 %v127, %v126
  %v135 = vpack.c.b16 %v129, %v128
  %v136 = vpack.c.b16 %v131, %v130
  %v137 = vpack.c.b16 %v133, %v132
  %vm142 = vcmask 523264
  %v144 = vsel %vm142, %v106, 0
  %v147 = vsel %vm142, %v107, 0
  %v150 = vsel %vm142, %v108, 0
  %v153 = vsel %vm142, %v109, 0
  %155 = vmatprep.subr.bf16.mxu0 0
  %156 = vmatpush1.bf16.msra.mxu0 %v134
  %157 = vmatprep.subr.bf16.mxu0 0
  %158 = vmatpush1.bf16.msra.mxu0 %v135
  %159 = vmatprep.subr.bf16.mxu0 0
  %160 = vmatpush1.bf16.msra.mxu0 %v136
  %161 = vmatprep.subr.bf16.mxu0 0
  %162 = vmatpush1.bf16.msra.mxu0 %v137
  %163 = vmatprep.subr.bf16.mxu0 0
  %164 = vmatpush1.bf16.msra.mxu0 0
  %165 = vmatprep.subr.bf16.mxu0 0
  %166 = vmatpush1.bf16.msra.mxu0 0
  %167 = vmatprep.subr.bf16.mxu0 0
  %168 = vmatpush1.bf16.msra.mxu0 0
  %169 = vmatprep.subr.bf16.mxu0 0
  %170 = vmatpush1.bf16.msra.mxu0 0
  %171 = vmatprep.subr.bf16.mxu0 0
  %172 = vmatpush1.bf16.msra.mxu0 0
  %173 = vmatprep.subr.bf16.mxu0 0
  %174 = vmatpush1.bf16.msra.mxu0 0
  %175 = vmatprep.subr.bf16.mxu0 0
  %176 = vmatpush1.bf16.msra.mxu0 0
  %177 = vmatprep.subr.bf16.mxu0 0
  %178 = vmatpush1.bf16.msra.mxu0 0
  %179 = vmatprep.subr.bf16.mxu0 0
  %180 = vmatpush1.bf16.msra.mxu0 0
  %181 = vmatprep.subr.bf16.mxu0 0
  %182 = vmatpush1.bf16.msra.mxu0 0
  %183 = vmatprep.subr.bf16.mxu0 0
  %184 = vmatpush1.bf16.msra.mxu0 0
  %185 = vmatprep.subr.bf16.mxu0 0
  %186 = vmatpush1.bf16.msra.mxu0 0
  %187 = vmatprep.mubr.bf16.mxu0 0
  %188 = vmatmul.mubr.bf16.gmra.mrb[0].mxu0 %v144
  %v189 = vpop.f32.mrb[0].mxu0
  %v190 = vadd.f32 0.0, %v189
  %v191 = vpop.f32.mrb[0].mxu0
  %v192 = vpop.f32.mrb[0].mxu0
  %v193 = vadd.f32 0.0, %v192
  %v194 = vpop.f32.mrb[0].mxu0
  %195 = vmatprep.mubr.bf16.mxu0 0
  %196 = vmatmul.mubr.bf16.gmra.mrb[0].mxu0 %v147
  %v197 = vpop.f32.mrb[0].mxu0
  %v198 = vadd.f32 0.0, %v197
  %v199 = vpop.f32.mrb[0].mxu0
  %v200 = vpop.f32.mrb[0].mxu0
  %v201 = vadd.f32 0.0, %v200
  %v202 = vpop.f32.mrb[0].mxu0
  %203 = vmatprep.mubr.bf16.mxu0 0
  %204 = vmatmul.mubr.bf16.gmra.mrb[0].mxu0 %v150
  %v205 = vpop.f32.mrb[0].mxu0
  %v206 = vadd.f32 0.0, %v205
  %v207 = vpop.f32.mrb[0].mxu0
  %v208 = vpop.f32.mrb[0].mxu0
  %v209 = vadd.f32 0.0, %v208
  %v210 = vpop.f32.mrb[0].mxu0
  %211 = vmatprep.mubr.bf16.mxu0 0
  %212 = vmatmul.mubr.bf16.gmra.mrb[0].mxu0 %v153
  %v213 = vpop.f32.mrb[0].mxu0
  %v214 = vadd.f32 0.0, %v213
  %v215 = vpop.f32.mrb[0].mxu0
  %v216 = vpop.f32.mrb[0].mxu0
  %v217 = vadd.f32 0.0, %v216
  %v218 = vpop.f32.mrb[0].mxu0
  %219 = vdwg.mxu0
  %v220 = vsel %vm142, %v190, 0.0
  %v221 = vsel %vm142, %v193, 0.0
  %v222 = vadd.f32 %v220, %v221
  %v223 = vsel %vm142, %v198, 0.0
  %v224 = vadd.f32 %v222, %v223
  %v225 = vsel %vm142, %v201, 0.0
  %v226 = vadd.f32 %v224, %v225
  %v227 = vsel %vm142, %v206, 0.0
  %v228 = vadd.f32 %v226, %v227
  %v229 = vsel %vm142, %v209, 0.0
  %v230 = vadd.f32 %v228, %v229
  %v231 = vsel %vm142, %v214, 0.0
  %v232 = vadd.f32 %v230, %v231
  %v233 = vsel %vm142, %v217, 0.0
  %v234 = vadd.f32 %v232, %v233
  %v235 = vrot.slane %v234, 4
  %v236 = vadd.f32 %v234, %v235
  %v237 = vrot.slane %v236, 2
  %v238 = vadd.f32 %v236, %v237
  %v239 = vrot.slane %v238, 1
  %v240 = vadd.f32 %v238, %v239
  %v241 = vmul.f32 %v190, %v190
  %v242 = vmul.f32 %v193, %v193
  %v243 = vmul.f32 %v198, %v198
  %v244 = vmul.f32 %v201, %v201
  %v245 = vmul.f32 %v206, %v206
  %v246 = vmul.f32 %v209, %v209
  %v247 = vmul.f32 %v214, %v214
  %v248 = vmul.f32 %v217, %v217
  %v249 = vsel %vm142, %v241, 0.0
  %v250 = vsel %vm142, %v242, 0.0
  %v251 = vadd.f32 %v249, %v250
  %v252 = vsel %vm142, %v243, 0.0
  %v253 = vadd.f32 %v251, %v252
  %v254 = vsel %vm142, %v244, 0.0
  %v255 = vadd.f32 %v253, %v254
  %v256 = vsel %vm142, %v245, 0.0
  %v257 = vadd.f32 %v255, %v256
  %v258 = vsel %vm142, %v246, 0.0
  %v259 = vadd.f32 %v257, %v258
  %v260 = vsel %vm142, %v247, 0.0
  %v261 = vadd.f32 %v259, %v260
  %v262 = vsel %vm142, %v248, 0.0
  %v263 = vadd.f32 %v261, %v262
  %v264 = vrot.slane %v263, 4
  %v265 = vadd.f32 %v263, %v264
  %v266 = vrot.slane %v265, 2
  %v267 = vadd.f32 %v265, %v266
  %v268 = vrot.slane %v267, 1
  %v269 = vadd.f32 %v267, %v268
  %p270 = scmp.eq.s32.totalorder 0, 0
  %p271 = scmp.eq.s32.totalorder 0, 0
  %p272 = pnand %p270, %p271
  %p273 = pneg %p272
  // Predicated region
  $region18: #{simclr_pointnet_forward.7} parent=0 // pred_check
    _
  $region19: #{simclr_pointnet_forward.7} parent=0 // pred_check_branch
    %275 = sbr.rel (%p272) target = $region21
  $region20: #{simclr_pointnet_forward.7} parent=0 // pred_region
    %vm276 = vcmask 516096
    %277 = vst.msk [vmem:[%s5] sm:$0x1] %vm276, %v240
    %278 = vst.msk [vmem:[%s6] sm:$0x1] %vm276, %v269
  $region21: #{simclr_pointnet_forward.7} parent=0 // pred_fallthru
    _
  %p279 = scmp.ne.s32.totalorder 0, 0
  %p280 = scmp.ne.s32.totalorder 0, 0
  %p281 = por %p279, %p280
  // Predicated region
  $region22: #{simclr_pointnet_forward.7} parent=0 // pred_check
    %p282 = pneg %p281
  $region23: #{simclr_pointnet_forward.7} parent=0 // pred_check_branch
    %284 = sbr.rel (%p282) target = $region25
  $region24: #{simclr_pointnet_forward.7} parent=0 // pred_region
    %v285 = vld [vmem:[%s5] sm:$0x1]
    %v286 = vadd.f32 %v285, %v240
    %vm287 = vcmask 516096
    %288 = vst.msk [vmem:[%s5] sm:$0x1] %vm287, %v286
    %v289 = vld [vmem:[%s6] sm:$0x1]
    %v290 = vadd.f32 %v289, %v269
    %291 = vst.msk [vmem:[%s6] sm:$0x1] %vm287, %v290
  $region25: #{simclr_pointnet_forward.7} parent=0 // pred_fallthru
    _
  %v292 = vpack.c.bf16 %v193, %v190
  %v293 = vpack.c.bf16 %v201, %v198
  %v294 = vpack.c.bf16 %v209, %v206
  %v295 = vpack.c.bf16 %v217, %v214
  %v300 = vunpack.c.l.b16 %v292
  %v301 = vunpack.c.h.b16 %v292
  %v302 = vunpack.c.l.b16 %v293
  %v303 = vunpack.c.h.b16 %v293
  %v304 = vunpack.c.l.b16 %v294
  %v305 = vunpack.c.h.b16 %v294
  %v306 = vunpack.c.l.b16 %v295
  %v307 = vunpack.c.h.b16 %v295
  %v308 = vpack.c.b16 %v300, %v300
  %v309 = vpack.c.b16 %v301, %v301
  %v310 = vpack.c.b16 %v302, %v302
  %v311 = vpack.c.b16 %v303, %v303
  %v312 = vpack.c.b16 %v304, %v304
  %v313 = vpack.c.b16 %v305, %v305
  %v314 = vpack.c.b16 %v306, %v306
  %v315 = vpack.c.b16 %v307, %v307
  %vm324 = vcmask 519168
  %325 = vst.msk [vmem:[%s4] sm:$0xf] %vm324, %v308
  %326 = vst.msk [vmem:[%s4 + $0x4] sm:$0xf] %vm324, %v309
  %327 = vst.msk [vmem:[%s4 + $0x8] sm:$0xf] %vm324, %v310
  %328 = vst.msk [vmem:[%s4 + $0xc] sm:$0xf] %vm324, %v311
  %329 = vst.msk [vmem:[%s4 + $0x10] sm:$0xf] %vm324, %v312
  %330 = vst.msk [vmem:[%s4 + $0x14] sm:$0xf] %vm324, %v313
  %331 = vst.msk [vmem:[%s4 + $0x18] sm:$0xf] %vm324, %v314
  %332 = vst.msk [vmem:[%s4 + $0x1c] sm:$0xf] %vm324, %v315
  // Predicated region
  $region26: #{simclr_pointnet_forward.7} parent=0 // pred_check
    _
  $region27: #{simclr_pointnet_forward.7} parent=0 // pred_check_branch
    %334 = sbr.rel (0) target = $region29
  $region28: #{simclr_pointnet_forward.7} parent=0 // pred_region
    _
  $region29: #{simclr_pointnet_forward.7} parent=0 // pred_fallthru
    _
  // Predicated region
  $region30: #{simclr_pointnet_forward.7} parent=0 // pred_check
    _
  $region31: #{simclr_pointnet_forward.7} parent=0 // pred_check_branch
    %336 = sbr.rel (0) target = $region33
  $region32: #{simclr_pointnet_forward.7} parent=0 // pred_region
    _
  $region33: #{simclr_pointnet_forward.7} parent=0 // pred_fallthru
    _
  // Predicated region
  $region34: #{simclr_pointnet_forward.7} parent=0 // pred_check
    _
  $region35: #{simclr_pointnet_forward.7} parent=0 // pred_check_branch
    %338 = sbr.rel (0) target = $region37
  $region36: #{simclr_pointnet_forward.7} parent=0 // pred_region
    _
  $region37: #{simclr_pointnet_forward.7} parent=0 // pred_fallthru
    _
  // Predicated region
  $region38: #{simclr_pointnet_forward.7} parent=0 // pred_check
    _
  $region39: #{simclr_pointnet_forward.7} parent=0 // pred_check_branch
    %340 = sbr.rel (0) target = $region41
  $region40: #{simclr_pointnet_forward.7} parent=0 // pred_region
    _
  $region41: #{simclr_pointnet_forward.7} parent=0 // pred_fallthru
    _
  // Predicated region
  $region42: #{simclr_pointnet_forward.7} parent=0 // pred_check
    _
  $region43: #{simclr_pointnet_forward.7} parent=0 // pred_check_branch
    %342 = sbr.rel (0) target = $region45
  $region44: #{simclr_pointnet_forward.7} parent=0 // pred_region
    _
  $region45: #{simclr_pointnet_forward.7} parent=0 // pred_fallthru
    _
  // Predicated region
  $region46: #{simclr_pointnet_forward.7} parent=0 // pred_check
    _
  $region47: #{simclr_pointnet_forward.7} parent=0 // pred_check_branch
    %344 = sbr.rel (0) target = $region49
  $region48: #{simclr_pointnet_forward.7} parent=0 // pred_region
    _
  $region49: #{simclr_pointnet_forward.7} parent=0 // pred_fallthru
    _

// kernel: simclr_pointnet_forward.6
$region0: #{simclr_pointnet_forward.6}
  #allocation0 [shape = 'u32[]', space=smem, size = 0x4, offset = 0x4, fixed_abs, tag = 'smem constant byte address 0x4 - core index']
  #allocation1 [shape = 'u32[144,128]{1,0:T(1,128)}', space=vmem, size = 0x12000, scoped, tag = 'internal scratch']
  %s0 = inlined_call_operand.vmem [shape: f32[2,32,8], index: 0, kind: input, shape index: {}]
  %s1 = inlined_call_operand.vmem [shape: f32[1,8], index: 1, kind: input, shape index: {}]
  %s2 = inlined_call_operand.vmem [shape: f32[1,8], index: 2, kind: input, shape index: {}]
  %s3 = inlined_call_operand.vmem [shape: f32[8,64], index: 3, kind: input, shape index: {}]
  %s4 = inlined_call_operand.vmem [shape: bf16[2,32,64], index: 4, kind: output, shape index: {0}]
  %s5 = inlined_call_operand.vmem [shape: f32[1,64], index: 5, kind: output, shape index: {1}]
  %s6 = inlined_call_operand.vmem [shape: f32[1,64], index: 6, kind: output, shape index: {2}]
  %7 = xla_tuple %s4, %s5, %s6
  %s8 = sld [smem:[#allocation0]]
  $region50: #{simclr_pointnet_forward.6} parent=0
    _
  %s10 = ssub.s32 1, %s8
  %s11 = scalar_select 0, %s10, %s8
  // Predicated region
  $region2: #{simclr_pointnet_forward.6} parent=0 // pred_check
    _
  $region3: #{simclr_pointnet_forward.6} parent=0 // pred_check_branch
    %13 = sbr.rel (0) target = $region5
  $region4: #{simclr_pointnet_forward.6} parent=0 // pred_region
    _
  $region5: #{simclr_pointnet_forward.6} parent=0 // pred_fallthru
    _
  // Predicated region
  $region6: #{simclr_pointnet_forward.6} parent=0 // pred_check
    _
  $region7: #{simclr_pointnet_forward.6} parent=0 // pred_check_branch
    %15 = sbr.rel (0) target = $region9
  $region8: #{simclr_pointnet_forward.6} parent=0 // pred_region
    _
  $region9: #{simclr_pointnet_forward.6} parent=0 // pred_fallthru
    _
  // Predicated region
  $region10: #{simclr_pointnet_forward.6} parent=0 // pred_check
    _
  $region11: #{simclr_pointnet_forward.6} parent=0 // pred_check_branch
    %17 = sbr.rel (0) target = $region13
  $region12: #{simclr_pointnet_forward.6} parent=0 // pred_region
    _
  $region13: #{simclr_pointnet_forward.6} parent=0 // pred_fallthru
    _
  // Predicated region
  $region14: #{simclr_pointnet_forward.6} parent=0 // pred_check
    _
  $region15: #{simclr_pointnet_forward.6} parent=0 // pred_check_branch
    %19 = sbr.rel (0) target = $region17
  $region16: #{simclr_pointnet_forward.6} parent=0 // pred_region
    _
  $region17: #{simclr_pointnet_forward.6} parent=0 // pred_fallthru
    _
  %v20 = vld [vmem:[%s0] sm:$0xff]
  %v21 = vld [vmem:[%s0 + $0x8] sm:$0xff]
  %v22 = vld [vmem:[%s0 + $0x10] sm:$0xff]
  %v23 = vld [vmem:[%s0 + $0x18] sm:$0xff]
  %v24 = vld [vmem:[%s0 + $0x20] sm:$0xff]
  %v25 = vld [vmem:[%s0 + $0x28] sm:$0xff]
  %v26 = vld [vmem:[%s0 + $0x30] sm:$0xff]
  %v27 = vld [vmem:[%s0 + $0x38] sm:$0xff]
  %v28 = vld [vmem:[%s3] sm:$0xff]
  %vm29 = vcmask 64512
  %v31 = vsel %vm29, %v20, 0
  %v34 = vsel %vm29, %v21, 0
  %v37 = vsel %vm29, %v22, 0
  %v40 = vsel %vm29, %v23, 0
  %v43 = vsel %vm29, %v24, 0
  %v46 = vsel %vm29, %v25, 0
  %v49 = vsel %vm29, %v26, 0
  %v52 = vsel %vm29, %v27, 0
  %54 = vmatprep.subr.mxu0 0.0
  %55 = vmatpush1.msra.mxu0 %v28
  %56 = vmatprep.subr.mxu0 0.0
  %57 = vmatpush1.msra.mxu0 0.0
  %58 = vmatprep.subr.mxu0 0.0
  %59 = vmatpush1.msra.mxu0 0.0
  %60 = vmatprep.subr.mxu0 0.0
  %61 = vmatpush1.msra.mxu0 0.0
  %62 = vmatprep.subr.mxu0 0.0
  %63 = vmatpush1.msra.mxu0 0.0
  %64 = vmatprep.subr.mxu0 0.0
  %65 = vmatpush1.msra.mxu0 0.0
  %66 = vmatprep.subr.mxu0 0.0
  %67 = vmatpush1.msra.mxu0 0.0
  %68 = vmatprep.subr.mxu0 0.0
  %69 = vmatpush1.msra.mxu0 0.0
  %70 = vmatprep.subr.mxu0 0.0
  %71 = vmatpush1.msra.mxu0 0.0
  %72 = vmatprep.subr.mxu0 0.0
  %73 = vmatpush1.msra.mxu0 0.0
  %74 = vmatprep.subr.mxu0 0.0
  %75 = vmatpush1.msra.mxu0 0.0
  %76 = vmatprep.subr.mxu0 0.0
  %77 = vmatpush1.msra.mxu0 0.0
  %78 = vmatprep.subr.mxu0 0.0
  %79 = vmatpush1.msra.mxu0 0.0
  %80 = vmatprep.subr.mxu0 0.0
  %81 = vmatpush1.msra.mxu0 0.0
  %82 = vmatprep.subr.mxu0 0.0
  %83 = vmatpush1.msra.mxu0 0.0
  %84 = vmatprep.subr.mxu0 0.0
  %85 = vmatpush1.msra.mxu0 0.0
  %86 = vmatprep.subr.mxu0 0.0
  %87 = vmatpush1.msra.mxu0 0.0
  %88 = vmatprep.subr.mxu0 0.0
  %89 = vmatpush1.msra.mxu0 0.0
  %90 = vmatprep.subr.mxu0 0.0
  %91 = vmatpush1.msra.mxu0 0.0
  %92 = vmatprep.subr.mxu0 0.0
  %93 = vmatpush1.msra.mxu0 0.0
  %94 = vmatprep.subr.mxu0 0.0
  %95 = vmatpush1.msra.mxu0 0.0
  %96 = vmatprep.subr.mxu0 0.0
  %97 = vmatpush1.msra.mxu0 0.0
  %98 = vmatprep.subr.mxu0 0.0
  %99 = vmatpush1.msra.mxu0 0.0
  %100 = vmatprep.subr.mxu0 0.0
  %101 = vmatpush1.msra.mxu0 0.0
  %102 = vmatprep.subr.mxu0 0.0
  %103 = vmatpush1.msra.mxu0 0.0
  %104 = vmatprep.subr.mxu0 0.0
  %105 = vmatpush1.msra.mxu0 0.0
  %106 = vmatprep.subr.mxu0 0.0
  %107 = vmatpush1.msra.mxu0 0.0
  %108 = vmatprep.subr.mxu0 0.0
  %109 = vmatpush1.msra.mxu0 0.0
  %110 = vmatprep.subr.mxu0 0.0
  %111 = vmatpush1.msra.mxu0 0.0
  %112 = vmatprep.subr.mxu0 0.0
  %113 = vmatpush1.msra.mxu0 0.0
  %114 = vmatprep.subr.mxu0 0.0
  %115 = vmatpush1.msra.mxu0 0.0
  %116 = vmatprep.subr.mxu0 0.0
  %117 = vmatpush1.msra.mxu0 0.0
  %118 = vmatprep.mubr.f32.mxu0 0.0
  %119 = vmatmul.mubr.f32.gmra.mrb[0].mxu0 %v31
  %v120 = vpop.f32.mrb[0].mxu0
  %v121 = vadd.f32 0.0, %v120
  %v122 = vpop.f32.mrb[0].mxu0
  %123 = vmatprep.mubr.f32.mxu0 0.0
  %124 = vmatmul.mubr.f32.gmra.mrb[0].mxu0 %v34
  %v125 = vpop.f32.mrb[0].mxu0
  %v126 = vadd.f32 0.0, %v125
  %v127 = vpop.f32.mrb[0].mxu0
  %128 = vmatprep.mubr.f32.mxu0 0.0
  %129 = vmatmul.mubr.f32.gmra.mrb[0].mxu0 %v37
  %v130 = vpop.f32.mrb[0].mxu0
  %v131 = vadd.f32 0.0, %v130
  %v132 = vpop.f32.mrb[0].mxu0
  %133 = vmatprep.mubr.f32.mxu0 0.0
  %134 = vmatmul.mubr.f32.gmra.mrb[0].mxu0 %v40
  %v135 = vpop.f32.mrb[0].mxu0
  %v136 = vadd.f32 0.0, %v135
  %v137 = vpop.f32.mrb[0].mxu0
  %138 = vmatprep.mubr.f32.mxu0 0.0
  %139 = vmatmul.mubr.f32.gmra.mrb[0].mxu0 %v43
  %v140 = vpop.f32.mrb[0].mxu0
  %v141 = vadd.f32 0.0, %v140
  %v142 = vpop.f32.mrb[0].mxu0
  %143 = vmatprep.mubr.f32.mxu0 0.0
  %144 = vmatmul.mubr.f32.gmra.mrb[0].mxu0 %v46
  %v145 = vpop.f32.mrb[0].mxu0
  %v146 = vadd.f32 0.0, %v145
  %v147 = vpop.f32.mrb[0].mxu0
  %148 = vmatprep.mubr.f32.mxu0 0.0
  %149 = vmatmul.mubr.f32.gmra.mrb[0].mxu0 %v49
  %v150 = vpop.f32.mrb[0].mxu0
  %v151 = vadd.f32 0.0, %v150
  %v152 = vpop.f32.mrb[0].mxu0
  %153 = vmatprep.mubr.f32.mxu0 0.0
  %154 = vmatmul.mubr.f32.gmra.mrb[0].mxu0 %v52
  %v155 = vpop.f32.mrb[0].mxu0
  %v156 = vadd.f32 0.0, %v155
  %v157 = vpop.f32.mrb[0].mxu0
  %158 = vdwg.mxu0
  %vm159 = vcmask 523264
  %v160 = vsel %vm159, %v121, 0.0
  %v161 = vsel %vm159, %v126, 0.0
  %v162 = vadd.f32 %v160, %v161
  %v163 = vsel %vm159, %v131, 0.0
  %v164 = vadd.f32 %v162, %v163
  %v165 = vsel %vm159, %v136, 0.0
  %v166 = vadd.f32 %v164, %v165
  %v167 = vsel %vm159, %v141, 0.0
  %v168 = vadd.f32 %v166, %v167
  %v169 = vsel %vm159, %v146, 0.0
  %v170 = vadd.f32 %v168, %v169
  %v171 = vsel %vm159, %v151, 0.0
  %v172 = vadd.f32 %v170, %v171
  %v173 = vsel %vm159, %v156, 0.0
  %v174 = vadd.f32 %v172, %v173
  %v175 = vrot.slane %v174, 4
  %v176 = vadd.f32 %v174, %v175
  %v177 = vrot.slane %v176, 2
  %v178 = vadd.f32 %v176, %v177
  %v179 = vrot.slane %v178, 1
  %v180 = vadd.f32 %v178, %v179
  %v181 = vmul.f32 %v121, %v121
  %v182 = vmul.f32 %v126, %v126
  %v183 = vmul.f32 %v131, %v131
  %v184 = vmul.f32 %v136, %v136
  %v185 = vmul.f32 %v141, %v141
  %v186 = vmul.f32 %v146, %v146
  %v187 = vmul.f32 %v151, %v151
  %v188 = vmul.f32 %v156, %v156
  %v189 = vsel %vm159, %v181, 0.0
  %v190 = vsel %vm159, %v182, 0.0
  %v191 = vadd.f32 %v189, %v190
  %v192 = vsel %vm159, %v183, 0.0
  %v193 = vadd.f32 %v191, %v192
  %v194 = vsel %vm159, %v184, 0.0
  %v195 = vadd.f32 %v193, %v194
  %v196 = vsel %vm159, %v185, 0.0
  %v197 = vadd.f32 %v195, %v196
  %v198 = vsel %vm159, %v186, 0.0
  %v199 = vadd.f32 %v197, %v198
  %v200 = vsel %vm159, %v187, 0.0
  %v201 = vadd.f32 %v199, %v200
  %v202 = vsel %vm159, %v188, 0.0
  %v203 = vadd.f32 %v201, %v202
  %v204 = vrot.slane %v203, 4
  %v205 = vadd.f32 %v203, %v204
  %v206 = vrot.slane %v205, 2
  %v207 = vadd.f32 %v205, %v206
  %v208 = vrot.slane %v207, 1
  %v209 = vadd.f32 %v207, %v208
  %p210 = scmp.eq.s32.totalorder 0, 0
  %p211 = scmp.eq.s32.totalorder 0, 0
  %p212 = pnand %p210, %p211
  %p213 = pneg %p212
  // Predicated region
  $region18: #{simclr_pointnet_forward.6} parent=0 // pred_check
    _
  $region19: #{simclr_pointnet_forward.6} parent=0 // pred_check_branch
    %215 = sbr.rel (%p212) target = $region21
  $region20: #{simclr_pointnet_forward.6} parent=0 // pred_region
    %vm216 = vcmask 516096
    %217 = vst.msk [vmem:[%s5] sm:$0x1] %vm216, %v180
    %218 = vst.msk [vmem:[%s6] sm:$0x1] %vm216, %v209
  $region21: #{simclr_pointnet_forward.6} parent=0 // pred_fallthru
    _
  %p219 = scmp.ne.s32.totalorder 0, 0
  %p220 = scmp.ne.s32.totalorder 0, 0
  %p221 = por %p219, %p220
  // Predicated region
  $region22: #{simclr_pointnet_forward.6} parent=0 // pred_check
    %p222 = pneg %p221
  $region23: #{simclr_pointnet_forward.6} parent=0 // pred_check_branch
    %224 = sbr.rel (%p222) target = $region25
  $region24: #{simclr_pointnet_forward.6} parent=0 // pred_region
    %v225 = vld [vmem:[%s5] sm:$0x1]
    %v226 = vadd.f32 %v225, %v180
    %vm227 = vcmask 516096
    %228 = vst.msk [vmem:[%s5] sm:$0x1] %vm227, %v226
    %v229 = vld [vmem:[%s6] sm:$0x1]
    %v230 = vadd.f32 %v229, %v209
    %231 = vst.msk [vmem:[%s6] sm:$0x1] %vm227, %v230
  $region25: #{simclr_pointnet_forward.6} parent=0 // pred_fallthru
    _
  %v232 = vpack.c.bf16 %v126, %v121
  %v233 = vpack.c.bf16 %v136, %v131
  %v234 = vpack.c.bf16 %v146, %v141
  %v235 = vpack.c.bf16 %v156, %v151
  %v240 = vunpack.c.l.b16 %v232
  %v241 = vunpack.c.h.b16 %v232
  %v242 = vunpack.c.l.b16 %v233
  %v243 = vunpack.c.h.b16 %v233
  %v244 = vunpack.c.l.b16 %v234
  %v245 = vunpack.c.h.b16 %v234
  %v246 = vunpack.c.l.b16 %v235
  %v247 = vunpack.c.h.b16 %v235
  %v248 = vpack.c.b16 %v240, %v240
  %v249 = vpack.c.b16 %v241, %v241
  %v250 = vpack.c.b16 %v242, %v242
  %v251 = vpack.c.b16 %v243, %v243
  %v252 = vpack.c.b16 %v244, %v244
  %v253 = vpack.c.b16 %v245, %v245
  %v254 = vpack.c.b16 %v246, %v246
  %v255 = vpack.c.b16 %v247, %v247
  %vm264 = vcmask 519168
  %265 = vst.msk [vmem:[%s4] sm:$0xf] %vm264, %v248
  %266 = vst.msk [vmem:[%s4 + $0x4] sm:$0xf] %vm264, %v249
  %267 = vst.msk [vmem:[%s4 + $0x8] sm:$0xf] %vm264, %v250
  %268 = vst.msk [vmem:[%s4 + $0xc] sm:$0xf] %vm264, %v251
  %269 = vst.msk [vmem:[%s4 + $0x10] sm:$0xf] %vm264, %v252
  %270 = vst.msk [vmem:[%s4 + $0x14] sm:$0xf] %vm264, %v253
  %271 = vst.msk [vmem:[%s4 + $0x18] sm:$0xf] %vm264, %v254
  %272 = vst.msk [vmem:[%s4 + $0x1c] sm:$0xf] %vm264, %v255
  // Predicated region
  $region26: #{simclr_pointnet_forward.6} parent=0 // pred_check
    _
  $region27: #{simclr_pointnet_forward.6} parent=0 // pred_check_branch
    %274 = sbr.rel (0) target = $region29
  $region28: #{simclr_pointnet_forward.6} parent=0 // pred_region
    _
  $region29: #{simclr_pointnet_forward.6} parent=0 // pred_fallthru
    _
  // Predicated region
  $region30: #{simclr_pointnet_forward.6} parent=0 // pred_check
    _
  $region31: #{simclr_pointnet_forward.6} parent=0 // pred_check_branch
    %276 = sbr.rel (0) target = $region33
  $region32: #{simclr_pointnet_forward.6} parent=0 // pred_region
    _
  $region33: #{simclr_pointnet_forward.6} parent=0 // pred_fallthru
    _
  // Predicated region
  $region34: #{simclr_pointnet_forward.6} parent=0 // pred_check
    _
  $region35: #{simclr_pointnet_forward.6} parent=0 // pred_check_branch
    %278 = sbr.rel (0) target = $region37
  $region36: #{simclr_pointnet_forward.6} parent=0 // pred_region
    _
  $region37: #{simclr_pointnet_forward.6} parent=0 // pred_fallthru
    _
  // Predicated region
  $region38: #{simclr_pointnet_forward.6} parent=0 // pred_check
    _
  $region39: #{simclr_pointnet_forward.6} parent=0 // pred_check_branch
    %280 = sbr.rel (0) target = $region41
  $region40: #{simclr_pointnet_forward.6} parent=0 // pred_region
    _
  $region41: #{simclr_pointnet_forward.6} parent=0 // pred_fallthru
    _
  // Predicated region
  $region42: #{simclr_pointnet_forward.6} parent=0 // pred_check
    _
  $region43: #{simclr_pointnet_forward.6} parent=0 // pred_check_branch
    %282 = sbr.rel (0) target = $region45
  $region44: #{simclr_pointnet_forward.6} parent=0 // pred_region
    _
  $region45: #{simclr_pointnet_forward.6} parent=0 // pred_fallthru
    _
  // Predicated region
  $region46: #{simclr_pointnet_forward.6} parent=0 // pred_check
    _
  $region47: #{simclr_pointnet_forward.6} parent=0 // pred_check_branch
    %284 = sbr.rel (0) target = $region49
  $region48: #{simclr_pointnet_forward.6} parent=0 // pred_region
    _
  $region49: #{simclr_pointnet_forward.6} parent=0 // pred_fallthru
    _

// kernel: simclr_pointnet_forward.10
$region0: #{simclr_pointnet_forward.10}
  #allocation0 [shape = 'u32[]', space=smem, size = 0x4, offset = 0x4, fixed_abs, tag = 'smem constant byte address 0x4 - core index']
  #allocation1 [shape = 'u32[144,128]{1,0:T(1,128)}', space=vmem, size = 0x12000, scoped, tag = 'internal scratch']
  %s0 = inlined_call_operand.vmem [shape: bf16[2,32,128], index: 0, kind: input, shape index: {}]
  %s1 = inlined_call_operand.vmem [shape: f32[1,128], index: 1, kind: input, shape index: {}]
  %s2 = inlined_call_operand.vmem [shape: f32[1,128], index: 2, kind: input, shape index: {}]
  %s3 = inlined_call_operand.vmem [shape: bf16[128,32], index: 3, kind: input, shape index: {}]
  %s4 = inlined_call_operand.vmem [shape: f32[1,32], index: 4, kind: output, shape index: {0}]
  %s5 = inlined_call_operand.vmem [shape: f32[1,32], index: 5, kind: output, shape index: {1}]
  %s6 = inlined_call_operand.vmem [shape: f32[1,2,32], index: 6, kind: output, shape index: {2}]
  %s7 = inlined_call_operand.vmem [shape: f32[1,2,32], index: 7, kind: output, shape index: {3}]
  %8 = xla_tuple %s4, %s5, %s6, %s7
  %s9 = sld [smem:[#allocation0]]
  $region66: #{simclr_pointnet_forward.10} parent=0
    _
  %s11 = ssub.s32 1, %s9
  %s12 = scalar_select 0, %s11, %s9
  // Predicated region
  $region2: #{simclr_pointnet_forward.10} parent=0 // pred_check
    _
  $region3: #{simclr_pointnet_forward.10} parent=0 // pred_check_branch
    %14 = sbr.rel (0) target = $region5
  $region4: #{simclr_pointnet_forward.10} parent=0 // pred_region
    _
  $region5: #{simclr_pointnet_forward.10} parent=0 // pred_fallthru
    _
  // Predicated region
  $region6: #{simclr_pointnet_forward.10} parent=0 // pred_check
    _
  $region7: #{simclr_pointnet_forward.10} parent=0 // pred_check_branch
    %16 = sbr.rel (0) target = $region9
  $region8: #{simclr_pointnet_forward.10} parent=0 // pred_region
    _
  $region9: #{simclr_pointnet_forward.10} parent=0 // pred_fallthru
    _
  // Predicated region
  $region10: #{simclr_pointnet_forward.10} parent=0 // pred_check
    _
  $region11: #{simclr_pointnet_forward.10} parent=0 // pred_check_branch
    %18 = sbr.rel (0) target = $region13
  $region12: #{simclr_pointnet_forward.10} parent=0 // pred_region
    _
  $region13: #{simclr_pointnet_forward.10} parent=0 // pred_fallthru
    _
  // Predicated region
  $region14: #{simclr_pointnet_forward.10} parent=0 // pred_check
    _
  $region15: #{simclr_pointnet_forward.10} parent=0 // pred_check_branch
    %20 = sbr.rel (0) target = $region17
  $region16: #{simclr_pointnet_forward.10} parent=0 // pred_region
    _
  $region17: #{simclr_pointnet_forward.10} parent=0 // pred_fallthru
    _
  %v22 = vld [vmem:[%s0] sm:$0xf]
  %v23 = vld [vmem:[%s0 + $0x4] sm:$0xf]
  %v24 = vld [vmem:[%s0 + $0x8] sm:$0xf]
  %v25 = vld [vmem:[%s0 + $0xc] sm:$0xf]
  %v26 = vld [vmem:[%s0 + $0x10] sm:$0xf]
  %v27 = vld [vmem:[%s0 + $0x14] sm:$0xf]
  %v28 = vld [vmem:[%s0 + $0x18] sm:$0xf]
  %v29 = vld [vmem:[%s0 + $0x1c] sm:$0xf]
  %v30 = vunpack.c.l.bf16 %v22
  %v31 = vunpack.c.l.bf16 %v23
  %v32 = vunpack.c.l.bf16 %v24
  %v33 = vunpack.c.l.bf16 %v25
  %v34 = vunpack.c.l.bf16 %v26
  %v35 = vunpack.c.l.bf16 %v27
  %v36 = vunpack.c.l.bf16 %v28
  %v37 = vunpack.c.l.bf16 %v29
  %v38 = vld [vmem:[%s1] sm:$0x1]
  %v40 = vlaneseq
  %v41 = vshrl.u32 %v40, 7
  %v42 = vsub.s32 0, %v41
  %v43 = vrot.slane %v38, %v42
  %v45 = vmul.f32 %v30, %v43
  %v46 = vmul.f32 %v31, %v43
  %v47 = vmul.f32 %v32, %v43
  %v48 = vmul.f32 %v33, %v43
  %v49 = vmul.f32 %v34, %v43
  %v50 = vmul.f32 %v35, %v43
  %v51 = vmul.f32 %v36, %v43
  %v52 = vmul.f32 %v37, %v43
  %v53 = vld [vmem:[%s2] sm:$0x1]
  %v55 = vlaneseq
  %v56 = vshrl.u32 %v55, 7
  %v57 = vsub.s32 0, %v56
  %v58 = vrot.slane %v53, %v57
  %v60 = vadd.f32 %v45, %v58
  %v61 = vadd.f32 %v46, %v58
  %v62 = vadd.f32 %v47, %v58
  %v63 = vadd.f32 %v48, %v58
  %v64 = vadd.f32 %v49, %v58
  %v65 = vadd.f32 %v50, %v58
  %v66 = vadd.f32 %v51, %v58
  %v67 = vadd.f32 %v52, %v58
  %v68 = vmax.f32 %v60, 0.0
  %v69 = vmax.f32 %v61, 0.0
  %v70 = vmax.f32 %v62, 0.0
  %v71 = vmax.f32 %v63, 0.0
  %v72 = vmax.f32 %v64, 0.0
  %v73 = vmax.f32 %v65, 0.0
  %v74 = vmax.f32 %v66, 0.0
  %v75 = vmax.f32 %v67, 0.0
  %s76 = smul.u32 0, 32
  %v77 = vlaneseq
  %v78 = vshrl.u32 %v77, 7
  %v79 = vadd.s32 %v78, 8
  %v80 = vadd.s32 %v78, 16
  %v81 = vadd.s32 %v78, 24
  %v82 = vstv %s76
  %v83 = vadd.s32 %v82, %v78
  %v84 = vadd.s32 %v82, %v79
  %v85 = vadd.s32 %v82, %v80
  %v86 = vadd.s32 %v82, %v81
  %vm87 = vcmp.lt.s32.totalorder %v83, 20
  %vm88 = vcmp.lt.s32.totalorder %v84, 20
  %vm89 = vcmp.lt.s32.totalorder %v85, 20
  %vm90 = vcmp.lt.s32.totalorder %v86, 20
  %v91 = vsel %vm87, 1, 0
  %v92 = vsel %vm88, 1, 0
  %v93 = vsel %vm89, 1, 0
  %v94 = vsel %vm90, 1, 0
  %vm95 = vcmp.eq.s32.totalorder %v91, 1
  %vm96 = vcmp.eq.s32.totalorder %v92, 1
  %vm97 = vcmp.eq.s32.totalorder %v93, 1
  %vm98 = vcmp.eq.s32.totalorder %v94, 1
  %v99 = vsel %vm95, %v68, 0.0
  %v100 = vsel %vm96, %v69, 0.0
  %v101 = vsel %vm97, %v70, 0.0
  %v102 = vsel %vm98, %v71, 0.0
  %v103 = vsel %vm95, %v72, 0.0
  %v104 = vsel %vm96, %v73, 0.0
  %v105 = vsel %vm97, %v74, 0.0
  %v106 = vsel %vm98, %v75, 0.0
  %v107 = vpack.c.bf16 %v100, %v99
  %v108 = vpack.c.bf16 %v102, %v101
  %v109 = vpack.c.bf16 %v104, %v103
  %v110 = vpack.c.bf16 %v106, %v105
  %v111 = vld [vmem:[%s3] sm:$0xf]
  %v112 = vld [vmem:[%s3 + $0x4] sm:$0xf]
  %v113 = vld [vmem:[%s3 + $0x8] sm:$0xf]
  %v114 = vld [vmem:[%s3 + $0xc] sm:$0xf]
  %v115 = vld [vmem:[%s3 + $0x10] sm:$0xf]
  %v116 = vld [vmem:[%s3 + $0x14] sm:$0xf]
  %v117 = vld [vmem:[%s3 + $0x18] sm:$0xf]
  %v118 = vld [vmem:[%s3 + $0x1c] sm:$0xf]
  %v119 = vld [vmem:[%s3 + $0x20] sm:$0xf]
  %v120 = vld [vmem:[%s3 + $0x24] sm:$0xf]
  %v121 = vld [vmem:[%s3 + $0x28] sm:$0xf]
  %v122 = vld [vmem:[%s3 + $0x2c] sm:$0xf]
  %v123 = vld [vmem:[%s3 + $0x30] sm:$0xf]
  %v124 = vld [vmem:[%s3 + $0x34] sm:$0xf]
  %v125 = vld [vmem:[%s3 + $0x38] sm:$0xf]
  %v126 = vld [vmem:[%s3 + $0x3c] sm:$0xf]
  %v143 = vunpack.c.l.b16 %v111
  %v144 = vunpack.c.l.b16 %v112
  %v145 = vunpack.c.l.b16 %v113
  %v146 = vunpack.c.l.b16 %v114
  %v147 = vunpack.c.l.b16 %v115
  %v148 = vunpack.c.l.b16 %v116
  %v149 = vunpack.c.l.b16 %v117
  %v150 = vunpack.c.l.b16 %v118
  %v151 = vunpack.c.l.b16 %v119
  %v152 = vunpack.c.l.b16 %v120
  %v153 = vunpack.c.l.b16 %v121
  %v154 = vunpack.c.l.b16 %v122
  %v155 = vunpack.c.l.b16 %v123
  %v156 = vunpack.c.l.b16 %v124
  %v157 = vunpack.c.l.b16 %v125
  %v158 = vunpack.c.l.b16 %v126
  %v159 = vpack.c.b16 %v144, %v143
  %v160 = vpack.c.b16 %v146, %v145
  %v161 = vpack.c.b16 %v148, %v147
  %v162 = vpack.c.b16 %v150, %v149
  %v163 = vpack.c.b16 %v152, %v151
  %v164 = vpack.c.b16 %v154, %v153
  %v165 = vpack.c.b16 %v156, %v155
  %v166 = vpack.c.b16 %v158, %v157
  %175 = vmatprep.subr.bf16.mxu0 0
  %176 = vmatpush1.bf16.msra.mxu0 %v159
  %177 = vmatprep.subr.bf16.mxu0 0
  %178 = vmatpush1.bf16.msra.mxu0 %v160
  %179 = vmatprep.subr.bf16.mxu0 0
  %180 = vmatpush1.bf16.msra.mxu0 %v161
  %181 = vmatprep.subr.bf16.mxu0 0
  %182 = vmatpush1.bf16.msra.mxu0 %v162
  %183 = vmatprep.subr.bf16.mxu0 0
  %184 = vmatpush1.bf16.msra.mxu0 %v163
  %185 = vmatprep.subr.bf16.mxu0 0
  %186 = vmatpush1.bf16.msra.mxu0 %v164
  %187 = vmatprep.subr.bf16.mxu0 0
  %188 = vmatpush1.bf16.msra.mxu0 %v165
  %189 = vmatprep.subr.bf16.mxu0 0
  %190 = vmatpush1.bf16.msra.mxu0 %v166
  %191 = vmatprep.subr.bf16.mxu0 0
  %192 = vmatpush1.bf16.msra.mxu0 0
  %193 = vmatprep.subr.bf16.mxu0 0
  %194 = vmatpush1.bf16.msra.mxu0 0
  %195 = vmatprep.subr.bf16.mxu0 0
  %196 = vmatpush1.bf16.msra.mxu0 0
  %197 = vmatprep.subr.bf16.mxu0 0
  %198 = vmatpush1.bf16.msra.mxu0 0
  %199 = vmatprep.subr.bf16.mxu0 0
  %200 = vmatpush1.bf16.msra.mxu0 0
  %201 = vmatprep.subr.bf16.mxu0 0
  %202 = vmatpush1.bf16.msra.mxu0 0
  %203 = vmatprep.subr.bf16.mxu0 0
  %204 = vmatpush1.bf16.msra.mxu0 0
  %205 = vmatprep.subr.bf16.mxu0 0
  %206 = vmatpush1.bf16.msra.mxu0 0
  %207 = vmatprep.mubr.bf16.mxu0 0
  %208 = vmatmul.mubr.bf16.gmra.mrb[0].mxu0 %v107
  %v209 = vpop.f32.mrb[0].mxu0
  %v210 = vadd.f32 0.0, %v209
  %v211 = vpop.f32.mrb[0].mxu0
  %v212 = vpop.f32.mrb[0].mxu0
  %v213 = vadd.f32 0.0, %v212
  %v214 = vpop.f32.mrb[0].mxu0
  %215 = vmatprep.mubr.bf16.mxu0 0
  %216 = vmatmul.mubr.bf16.gmra.mrb[0].mxu0 %v108
  %v217 = vpop.f32.mrb[0].mxu0
  %v218 = vadd.f32 0.0, %v217
  %v219 = vpop.f32.mrb[0].mxu0
  %v220 = vpop.f32.mrb[0].mxu0
  %v221 = vadd.f32 0.0, %v220
  %v222 = vpop.f32.mrb[0].mxu0
  %223 = vmatprep.mubr.bf16.mxu0 0
  %224 = vmatmul.mubr.bf16.gmra.mrb[0].mxu0 %v109
  %v225 = vpop.f32.mrb[0].mxu0
  %v226 = vadd.f32 0.0, %v225
  %v227 = vpop.f32.mrb[0].mxu0
  %v228 = vpop.f32.mrb[0].mxu0
  %v229 = vadd.f32 0.0, %v228
  %v230 = vpop.f32.mrb[0].mxu0
  %231 = vmatprep.mubr.bf16.mxu0 0
  %232 = vmatmul.mubr.bf16.gmra.mrb[0].mxu0 %v110
  %v233 = vpop.f32.mrb[0].mxu0
  %v234 = vadd.f32 0.0, %v233
  %v235 = vpop.f32.mrb[0].mxu0
  %v236 = vpop.f32.mrb[0].mxu0
  %v237 = vadd.f32 0.0, %v236
  %v238 = vpop.f32.mrb[0].mxu0
  %239 = vdwg.mxu0
  %vm240 = vcmask 261120
  %v241 = vsel %vm240, %v210, 0.0
  %v242 = vsel %vm240, %v213, 0.0
  %v243 = vadd.f32 %v241, %v242
  %v244 = vsel %vm240, %v218, 0.0
  %v245 = vadd.f32 %v243, %v244
  %v246 = vsel %vm240, %v221, 0.0
  %v247 = vadd.f32 %v245, %v246
  %v248 = vsel %vm240, %v226, 0.0
  %v249 = vadd.f32 %v247, %v248
  %v250 = vsel %vm240, %v229, 0.0
  %v251 = vadd.f32 %v249, %v250
  %v252 = vsel %vm240, %v234, 0.0
  %v253 = vadd.f32 %v251, %v252
  %v254 = vsel %vm240, %v237, 0.0
  %v255 = vadd.f32 %v253, %v254
  %v256 = vrot.slane %v255, 4
  %v257 = vadd.f32 %v255, %v256
  %v258 = vrot.slane %v257, 2
  %v259 = vadd.f32 %v257, %v258
  %v260 = vrot.slane %v259, 1
  %v261 = vadd.f32 %v259, %v260
  %v262 = vmul.f32 %v210, %v210
  %v263 = vmul.f32 %v213, %v213
  %v264 = vmul.f32 %v218, %v218
  %v265 = vmul.f32 %v221, %v221
  %v266 = vmul.f32 %v226, %v226
  %v267 = vmul.f32 %v229, %v229
  %v268 = vmul.f32 %v234, %v234
  %v269 = vmul.f32 %v237, %v237
  %v270 = vsel %vm240, %v262, 0.0
  %v271 = vsel %vm240, %v263, 0.0
  %v272 = vadd.f32 %v270, %v271
  %v273 = vsel %vm240, %v264, 0.0
  %v274 = vadd.f32 %v272, %v273
  %v275 = vsel %vm240, %v265, 0.0
  %v276 = vadd.f32 %v274, %v275
  %v277 = vsel %vm240, %v266, 0.0
  %v278 = vadd.f32 %v276, %v277
  %v279 = vsel %vm240, %v267, 0.0
  %v280 = vadd.f32 %v278, %v279
  %v281 = vsel %vm240, %v268, 0.0
  %v282 = vadd.f32 %v280, %v281
  %v283 = vsel %vm240, %v269, 0.0
  %v284 = vadd.f32 %v282, %v283
  %v285 = vrot.slane %v284, 4
  %v286 = vadd.f32 %v284, %v285
  %v287 = vrot.slane %v286, 2
  %v288 = vadd.f32 %v286, %v287
  %v289 = vrot.slane %v288, 1
  %v290 = vadd.f32 %v288, %v289
  %p291 = scmp.eq.s32.totalorder 0, 0
  %p292 = scmp.eq.s32.totalorder 0, 0
  %p293 = pnand %p291, %p292
  %p294 = pneg %p293
  // Predicated region
  $region18: #{simclr_pointnet_forward.10} parent=0 // pred_check
    _
  $region19: #{simclr_pointnet_forward.10} parent=0 // pred_check_branch
    %296 = sbr.rel (%p293) target = $region21
  $region20: #{simclr_pointnet_forward.10} parent=0 // pred_region
    %vm297 = vcmask 253952
    %298 = vst.msk [vmem:[%s4] sm:$0x1] %vm297, %v261
    %299 = vst.msk [vmem:[%s5] sm:$0x1] %vm297, %v290
  $region21: #{simclr_pointnet_forward.10} parent=0 // pred_fallthru
    _
  %p300 = scmp.ne.s32.totalorder 0, 0
  %p301 = scmp.ne.s32.totalorder 0, 0
  %p302 = por %p300, %p301
  // Predicated region
  $region22: #{simclr_pointnet_forward.10} parent=0 // pred_check
    %p303 = pneg %p302
  $region23: #{simclr_pointnet_forward.10} parent=0 // pred_check_branch
    %305 = sbr.rel (%p303) target = $region25
  $region24: #{simclr_pointnet_forward.10} parent=0 // pred_region
    %v306 = vld [vmem:[%s4] sm:$0x1]
    %v307 = vadd.f32 %v306, %v261
    %vm308 = vcmask 253952
    %309 = vst.msk [vmem:[%s4] sm:$0x1] %vm308, %v307
    %v310 = vld [vmem:[%s5] sm:$0x1]
    %v311 = vadd.f32 %v310, %v290
    %312 = vst.msk [vmem:[%s5] sm:$0x1] %vm308, %v311
  $region25: #{simclr_pointnet_forward.10} parent=0 // pred_fallthru
    _
  %v313 = vsel %vm95, %v210, -inf
  %v314 = vsel %vm96, %v213, -inf
  %v315 = vsel %vm97, %v218, -inf
  %v316 = vsel %vm98, %v221, -inf
  %v317 = vsel %vm95, %v226, -inf
  %v318 = vsel %vm96, %v229, -inf
  %v319 = vsel %vm97, %v234, -inf
  %v320 = vsel %vm98, %v237, -inf
  %v321 = vsel %vm240, %v313, -inf
  %v322 = vsel %vm240, %v314, -inf
  %v323 = vsel %vm240, %v315, -inf
  %v324 = vmax.f32 %v321, %v323
  %v325 = vsel %vm240, %v316, -inf
  %v326 = vmax.f32 %v322, %v325
  %v327 = vmax.f32 %v324, %v326
  %v328 = vrot.slane %v327, 4
  %v329 = vmax.f32 %v327, %v328
  %v330 = vrot.slane %v329, 2
  %v331 = vmax.f32 %v329, %v330
  %v332 = vrot.slane %v331, 1
  %v333 = vmax.f32 %v331, %v332
  %v334 = vsel %vm240, %v317, -inf
  %v335 = vsel %vm240, %v318, -inf
  %v336 = vsel %vm240, %v319, -inf
  %v337 = vmax.f32 %v334, %v336
  %v338 = vsel %vm240, %v320, -inf
  %v339 = vmax.f32 %v335, %v338
  %v340 = vmax.f32 %v337, %v339
  %v341 = vrot.slane %v340, 4
  %v342 = vmax.f32 %v340, %v341
  %v343 = vrot.slane %v342, 2
  %v344 = vmax.f32 %v342, %v343
  %v345 = vrot.slane %v344, 1
  %v346 = vmax.f32 %v344, %v345
  %v347 = vsel %vm95, %v210, inf
  %v348 = vsel %vm96, %v213, inf
  %v349 = vsel %vm97, %v218, inf
  %v350 = vsel %vm98, %v221, inf
  %v351 = vsel %vm95, %v226, inf
  %v352 = vsel %vm96, %v229, inf
  %v353 = vsel %vm97, %v234, inf
  %v354 = vsel %vm98, %v237, inf
  %v355 = vsel %vm240, %v347, inf
  %v356 = vsel %vm240, %v348, inf
  %v357 = vsel %vm240, %v349, inf
  %v358 = vmin.f32 %v355, %v357
  %v359 = vsel %vm240, %v350, inf
  %v360 = vmin.f32 %v356, %v359
  %v361 = vmin.f32 %v358, %v360
  %v362 = vrot.slane %v361, 4
  %v363 = vmin.f32 %v361, %v362
  %v364 = vrot.slane %v363, 2
  %v365 = vmin.f32 %v363, %v364
  %v366 = vrot.slane %v365, 1
  %v367 = vmin.f32 %v365, %v366
  %v368 = vsel %vm240, %v351, inf
  %v369 = vsel %vm240, %v352, inf
  %v370 = vsel %vm240, %v353, inf
  %v371 = vmin.f32 %v368, %v370
  %v372 = vsel %vm240, %v354, inf
  %v373 = vmin.f32 %v369, %v372
  %v374 = vmin.f32 %v371, %v373
  %v375 = vrot.slane %v374, 4
  %v376 = vmin.f32 %v374, %v375
  %v377 = vrot.slane %v376, 2
  %v378 = vmin.f32 %v376, %v377
  %v379 = vrot.slane %v378, 1
  %v380 = vmin.f32 %v378, %v379
  // Predicated region
  $region26: #{simclr_pointnet_forward.10} parent=0 // pred_check
    %p381 = pneg %p292
  $region27: #{simclr_pointnet_forward.10} parent=0 // pred_check_branch
    %383 = sbr.rel (%p381) target = $region29
  $region28: #{simclr_pointnet_forward.10} parent=0 // pred_region
    %vm386 = vcmask 1041409
    %v387 = vsel %vm386, %v346, %v333
    %vm389 = vcmask 254976
    %390 = vst.msk [vmem:[%s6] sm:$0x3] %vm389, %v387
    %v393 = vsel %vm386, %v380, %v367
    %395 = vst.msk [vmem:[%s7] sm:$0x3] %vm389, %v393
  $region29: #{simclr_pointnet_forward.10} parent=0 // pred_fallthru
    _
  // Predicated region
  $region30: #{simclr_pointnet_forward.10} parent=0 // pred_check
    %p396 = pneg %p301
  $region31: #{simclr_pointnet_forward.10} parent=0 // pred_check_branch
    %398 = sbr.rel (%p396) target = $region33
  $region32: #{simclr_pointnet_forward.10} parent=0 // pred_region
    %v399 = vld [vmem:[%s6] sm:$0x3]
    %vm402 = vcmask 1041409
    %v403 = vsel %vm402, %v346, %v333
    %v405 = vmax.f32 %v399, %v403
    %vm406 = vcmask 254976
    %407 = vst.msk [vmem:[%s6] sm:$0x3] %vm406, %v405
    %v408 = vld [vmem:[%s7] sm:$0x3]
    %v411 = vsel %vm402, %v380, %v367
    %v413 = vmin.f32 %v408, %v411
    %414 = vst.msk [vmem:[%s7] sm:$0x3] %vm406, %v413
  $region33: #{simclr_pointnet_forward.10} parent=0 // pred_fallthru
    _
  // Predicated region
  $region34: #{simclr_pointnet_forward.10} parent=0 // pred_check
    _
  $region35: #{simclr_pointnet_forward.10} parent=0 // pred_check_branch
    %416 = sbr.rel (0) target = $region37
  $region36: #{simclr_pointnet_forward.10} parent=0 // pred_region
    _
  $region37: #{simclr_pointnet_forward.10} parent=0 // pred_fallthru
    _
  // Predicated region
  $region38: #{simclr_pointnet_forward.10} parent=0 // pred_check
    _
  $region39: #{simclr_pointnet_forward.10} parent=0 // pred_check_branch
    %418 = sbr.rel (0) target = $region41
  $region40: #{simclr_pointnet_forward.10} parent=0 // pred_region
    _
  $region41: #{simclr_pointnet_forward.10} parent=0 // pred_fallthru
    _
  // Predicated region
  $region42: #{simclr_pointnet_forward.10} parent=0 // pred_check
    _
  $region43: #{simclr_pointnet_forward.10} parent=0 // pred_check_branch
    %420 = sbr.rel (0) target = $region45
  $region44: #{simclr_pointnet_forward.10} parent=0 // pred_region
    _
  $region45: #{simclr_pointnet_forward.10} parent=0 // pred_fallthru
    _
  // Predicated region
  $region46: #{simclr_pointnet_forward.10} parent=0 // pred_check
    _
  $region47: #{simclr_pointnet_forward.10} parent=0 // pred_check_branch
    %422 = sbr.rel (0) target = $region49
  $region48: #{simclr_pointnet_forward.10} parent=0 // pred_region
    _
  $region49: #{simclr_pointnet_forward.10} parent=0 // pred_fallthru
    _
  // Predicated region
  $region50: #{simclr_pointnet_forward.10} parent=0 // pred_check
    _
  $region51: #{simclr_pointnet_forward.10} parent=0 // pred_check_branch
    %424 = sbr.rel (0) target = $region53
  $region52: #{simclr_pointnet_forward.10} parent=0 // pred_region
    _
  $region53: #{simclr_pointnet_forward.10} parent=0 // pred_fallthru
    _
  // Predicated region
  $region54: #{simclr_pointnet_forward.10} parent=0 // pred_check
    _
  $region55: #{simclr_pointnet_forward.10} parent=0 // pred_check_branch
    %426 = sbr.rel (0) target = $region57
  $region56: #{simclr_pointnet_forward.10} parent=0 // pred_region
    _
  $region57: #{simclr_pointnet_forward.10} parent=0 // pred_fallthru
    _
  // Predicated region
  $region58: #{simclr_pointnet_forward.10} parent=0 // pred_check
    _
  $region59: #{simclr_pointnet_forward.10} parent=0 // pred_check_branch
    %428 = sbr.rel (0) target = $region61
  $region60: #{simclr_pointnet_forward.10} parent=0 // pred_region
    _
  $region61: #{simclr_pointnet_forward.10} parent=0 // pred_fallthru
    _
  // Predicated region
  $region62: #{simclr_pointnet_forward.10} parent=0 // pred_check
    _
  $region63: #{simclr_pointnet_forward.10} parent=0 // pred_check_branch
    %430 = sbr.rel (0) target = $region65
  $region64: #{simclr_pointnet_forward.10} parent=0 // pred_region
    _
  $region65: #{simclr_pointnet_forward.10} parent=0 // pred_fallthru
    _

// kernel: simclr_pointnet_forward.11
$region0: #{simclr_pointnet_forward.11}
  #allocation0 [shape = 'u32[]', space=smem, size = 0x4, offset = 0x4, fixed_abs, tag = 'smem constant byte address 0x4 - core index']
  #allocation1 [shape = 'u32[144,128]{1,0:T(1,128)}', space=vmem, size = 0x12000, scoped, tag = 'internal scratch']
  %s0 = inlined_call_operand.vmem [shape: f32[2,32], index: 0, kind: input, shape index: {}]
  %s1 = inlined_call_operand.vmem [shape: bf16[32,64], index: 1, kind: input, shape index: {}]
  %s2 = inlined_call_operand.vmem [shape: f32[1,64], index: 2, kind: input, shape index: {}]
  %s3 = inlined_call_operand.vmem [shape: f32[1,64], index: 3, kind: input, shape index: {}]
  %s4 = inlined_call_operand.vmem [shape: bf16[64,16], index: 4, kind: input, shape index: {}]
  %s5 = inlined_call_operand.hbm [shape: f32[2,16], index: 5, kind: output, shape index: {}]
  %s6 = sld [smem:[#allocation0]]
  $region30: #{simclr_pointnet_forward.11} parent=0
    _
  %s8 = ssub.s32 1, %s6
  %s9 = scalar_select 0, %s8, %s6
  $region1: #{simclr_pointnet_forward.11} parent=0
    #allocation2 [shape = 'u8[1024]{0}', space=vmem, size = 0x400, scoped, tag = 'output window, operand 0, single buffered']
    #allocation3 [shape = 's32[1]{0}', space=sflag, size = 0x4, scoped, tag = 'scoped memory for simclr_pointnet_forward.11']
    %10 = vsyncpa [#allocation3], 0
    // Predicated region
    $region2: #{simclr_pointnet_forward.11} parent=1 // pred_check
      _
    $region3: #{simclr_pointnet_forward.11} parent=1 // pred_check_branch
      %12 = sbr.rel (0) target = $region5
    $region4: #{simclr_pointnet_forward.11} parent=1 // pred_region
      _
    $region5: #{simclr_pointnet_forward.11} parent=1 // pred_fallthru
      _
    // Predicated region
    $region6: #{simclr_pointnet_forward.11} parent=1 // pred_check
      _
    $region7: #{simclr_pointnet_forward.11} parent=1 // pred_check_branch
      %14 = sbr.rel (0) target = $region9
    $region8: #{simclr_pointnet_forward.11} parent=1 // pred_region
      _
    $region9: #{simclr_pointnet_forward.11} parent=1 // pred_fallthru
      _
    // Predicated region
    $region10: #{simclr_pointnet_forward.11} parent=1 // pred_check
      _
    $region11: #{simclr_pointnet_forward.11} parent=1 // pred_check_branch
      %16 = sbr.rel (0) target = $region13
    $region12: #{simclr_pointnet_forward.11} parent=1 // pred_region
      _
    $region13: #{simclr_pointnet_forward.11} parent=1 // pred_fallthru
      _
    // Predicated region
    $region14: #{simclr_pointnet_forward.11} parent=1 // pred_check
      _
    $region15: #{simclr_pointnet_forward.11} parent=1 // pred_check_branch
      %18 = sbr.rel (0) target = $region17
    $region16: #{simclr_pointnet_forward.11} parent=1 // pred_region
      _
    $region17: #{simclr_pointnet_forward.11} parent=1 // pred_fallthru
      _
    // Predicated region
    $region18: #{simclr_pointnet_forward.11} parent=1 // pred_check
      _
    $region19: #{simclr_pointnet_forward.11} parent=1 // pred_check_branch
      %20 = sbr.rel (0) target = $region21
    $region20: #{simclr_pointnet_forward.11} parent=1 // pred_region
      _
    $region21: #{simclr_pointnet_forward.11} parent=1 // pred_fallthru
      _
    %v22 = vld [vmem:[%s0] sm:$0x3]
    %v23 = vpack.c.bf16 %v22, %v22
    %v24 = vld [vmem:[%s1] sm:$0xf]
    %v25 = vld [vmem:[%s1 + $0x4] sm:$0xf]
    %v26 = vld [vmem:[%s1 + $0x8] sm:$0xf]
    %v27 = vld [vmem:[%s1 + $0xc] sm:$0xf]
    %v32 = vunpack.c.l.b16 %v24
    %v33 = vunpack.c.l.b16 %v25
    %v34 = vunpack.c.l.b16 %v26
    %v35 = vunpack.c.l.b16 %v27
    %v36 = vpack.c.b16 %v33, %v32
    %v37 = vpack.c.b16 %v35, %v34
    %vm40 = vcmask 261120
    %v42 = vsel %vm40, %v23, 0
    %44 = vmatprep.subr.bf16.mxu0 0
    %45 = vmatpush1.bf16.msra.mxu0 %v36
    %46 = vmatprep.subr.bf16.mxu0 0
    %47 = vmatpush1.bf16.msra.mxu0 %v37
    %48 = vmatprep.subr.bf16.mxu0 0
    %49 = vmatpush1.bf16.msra.mxu0 0
    %50 = vmatprep.subr.bf16.mxu0 0
    %51 = vmatpush1.bf16.msra.mxu0 0
    %52 = vmatprep.subr.bf16.mxu0 0
    %53 = vmatpush1.bf16.msra.mxu0 0
    %54 = vmatprep.subr.bf16.mxu0 0
    %55 = vmatpush1.bf16.msra.mxu0 0
    %56 = vmatprep.subr.bf16.mxu0 0
    %57 = vmatpush1.bf16.msra.mxu0 0
    %58 = vmatprep.subr.bf16.mxu0 0
    %59 = vmatpush1.bf16.msra.mxu0 0
    %60 = vmatprep.subr.bf16.mxu0 0
    %61 = vmatpush1.bf16.msra.mxu0 0
    %62 = vmatprep.subr.bf16.mxu0 0
    %63 = vmatpush1.bf16.msra.mxu0 0
    %64 = vmatprep.subr.bf16.mxu0 0
    %65 = vmatpush1.bf16.msra.mxu0 0
    %66 = vmatprep.subr.bf16.mxu0 0
    %67 = vmatpush1.bf16.msra.mxu0 0
    %68 = vmatprep.subr.bf16.mxu0 0
    %69 = vmatpush1.bf16.msra.mxu0 0
    %70 = vmatprep.subr.bf16.mxu0 0
    %71 = vmatpush1.bf16.msra.mxu0 0
    %72 = vmatprep.subr.bf16.mxu0 0
    %73 = vmatpush1.bf16.msra.mxu0 0
    %74 = vmatprep.subr.bf16.mxu0 0
    %75 = vmatpush1.bf16.msra.mxu0 0
    %76 = vmatprep.mubr.bf16.mxu0 0
    %77 = vmatmul.mubr.bf16.gmra.mrb[0].mxu0 %v42
    %v78 = vpop.f32.mrb[0].mxu0
    %v79 = vadd.f32 0.0, %v78
    %v80 = vpop.f32.mrb[0].mxu0
    %v81 = vpop.f32.mrb[0].mxu0
    %v82 = vpop.f32.mrb[0].mxu0
    %83 = vdwg.mxu0
    %vm84 = vcmask 517120
    %v85 = vsel %vm84, %v79, 0.0
    %v86 = vrot.slane %v85, 4
    %v87 = vadd.f32 %v85, %v86
    %v88 = vrot.slane %v87, 2
    %v89 = vadd.f32 %v87, %v88
    %v90 = vrot.slane %v89, 1
    %v91 = vadd.f32 %v89, %v90
    %v92 = vrcp.pop 2.0
    %v93 = vmul.f32 %v91, %v92
    %v94 = vsub.f32 %v79, %v93
    %v95 = vmul.f32 %v94, %v94
    %v96 = vsel %vm84, %v95, 0.0
    %v97 = vrot.slane %v96, 4
    %v98 = vadd.f32 %v96, %v97
    %v99 = vrot.slane %v98, 2
    %v100 = vadd.f32 %v98, %v99
    %v101 = vrot.slane %v100, 1
    %v102 = vadd.f32 %v100, %v101
    %v103 = vmul.f32 %v102, %v92
    %v104 = vld [vmem:[%s2] sm:$0x1]
    %v105 = vadd.f32 %v103, 1e-05
    %v106 = vrsqrt.pop %v105
    %v107 = vmul.f32 %v104, %v106
    %v109 = vlaneseq
    %v110 = vshrl.u32 %v109, 7
    %v111 = vsub.s32 0, %v110
    %v112 = vrot.slane %v107, %v111
    %v114 = vmul.f32 %v94, %v112
    %v115 = vld [vmem:[%s3] sm:$0x1]
    %v117 = vlaneseq
    %v118 = vshrl.u32 %v117, 7
    %v119 = vsub.s32 0, %v118
    %v120 = vrot.slane %v115, %v119
    %v122 = vadd.f32 %v114, %v120
    %v123 = vmax.f32 %v122, 0.0
    %v124 = vpack.c.bf16 %v123, %v123
    %v125 = vld [vmem:[%s4] sm:$0xf]
    %v126 = vld [vmem:[%s4 + $0x4] sm:$0xf]
    %v127 = vld [vmem:[%s4 + $0x8] sm:$0xf]
    %v128 = vld [vmem:[%s4 + $0xc] sm:$0xf]
    %v129 = vld [vmem:[%s4 + $0x10] sm:$0xf]
    %v130 = vld [vmem:[%s4 + $0x14] sm:$0xf]
    %v131 = vld [vmem:[%s4 + $0x18] sm:$0xf]
    %v132 = vld [vmem:[%s4 + $0x1c] sm:$0xf]
    %v141 = vunpack.c.l.b16 %v125
    %v142 = vunpack.c.l.b16 %v126
    %v143 = vunpack.c.l.b16 %v127
    %v144 = vunpack.c.l.b16 %v128
    %v145 = vunpack.c.l.b16 %v129
    %v146 = vunpack.c.l.b16 %v130
    %v147 = vunpack.c.l.b16 %v131
    %v148 = vunpack.c.l.b16 %v132
    %v149 = vpack.c.b16 %v142, %v141
    %v150 = vpack.c.b16 %v144, %v143
    %v151 = vpack.c.b16 %v146, %v145
    %v152 = vpack.c.b16 %v148, %v147
    %vm157 = vcmask 523264
    %v159 = vsel %vm157, %v124, 0
    %161 = vmatprep.subr.bf16.mxu0 0
    %162 = vmatpush1.bf16.msra.mxu0 %v149
    %163 = vmatprep.subr.bf16.mxu0 0
    %164 = vmatpush1.bf16.msra.mxu0 %v150
    %165 = vmatprep.subr.bf16.mxu0 0
    %166 = vmatpush1.bf16.msra.mxu0 %v151
    %167 = vmatprep.subr.bf16.mxu0 0
    %168 = vmatpush1.bf16.msra.mxu0 %v152
    %169 = vmatprep.subr.bf16.mxu0 0
    %170 = vmatpush1.bf16.msra.mxu0 0
    %171 = vmatprep.subr.bf16.mxu0 0
    %172 = vmatpush1.bf16.msra.mxu0 0
    %173 = vmatprep.subr.bf16.mxu0 0
    %174 = vmatpush1.bf16.msra.mxu0 0
    %175 = vmatprep.subr.bf16.mxu0 0
    %176 = vmatpush1.bf16.msra.mxu0 0
    %177 = vmatprep.subr.bf16.mxu0 0
    %178 = vmatpush1.bf16.msra.mxu0 0
    %179 = vmatprep.subr.bf16.mxu0 0
    %180 = vmatpush1.bf16.msra.mxu0 0
    %181 = vmatprep.subr.bf16.mxu0 0
    %182 = vmatpush1.bf16.msra.mxu0 0
    %183 = vmatprep.subr.bf16.mxu0 0
    %184 = vmatpush1.bf16.msra.mxu0 0
    %185 = vmatprep.subr.bf16.mxu0 0
    %186 = vmatpush1.bf16.msra.mxu0 0
    %187 = vmatprep.subr.bf16.mxu0 0
    %188 = vmatpush1.bf16.msra.mxu0 0
    %189 = vmatprep.subr.bf16.mxu0 0
    %190 = vmatpush1.bf16.msra.mxu0 0
    %191 = vmatprep.subr.bf16.mxu0 0
    %192 = vmatpush1.bf16.msra.mxu0 0
    %193 = vmatprep.mubr.bf16.mxu0 0
    %194 = vmatmul.mubr.bf16.gmra.mrb[0].mxu0 %v159
    %v195 = vpop.f32.mrb[0].mxu0
    %v196 = vadd.f32 0.0, %v195
    %v197 = vpop.f32.mrb[0].mxu0
    %v198 = vpop.f32.mrb[0].mxu0
    %v199 = vpop.f32.mrb[0].mxu0
    %200 = vdwg.mxu0
    %vm201 = vcmask 123904
    %202 = vst.msk [vmem:[#allocation2] sm:$0x3] %vm201, %v196
    // Predicated region
    $region22: #{simclr_pointnet_forward.11} parent=1 // pred_check
      _
    $region23: #{simclr_pointnet_forward.11} parent=1 // pred_check_branch
      %204 = sbr.rel (0) target = $region25
    $region24: #{simclr_pointnet_forward.11} parent=1 // pred_region
      %s206 = ssub.s32 32, 32
      %207 = vsyncadd [#allocation3], %s206
      %s209 = sshll.u32 [#allocation2], 4
      %s210 = int_to_ptr.vmem [resolvable:$true] %s209
      %212 = dma.vmem_to_hbm [thread:$0]  %s210, 32, %s5, [#allocation3]
    $region25: #{simclr_pointnet_forward.11} parent=1 // pred_fallthru
      _
    // Predicated region
    $region26: #{simclr_pointnet_forward.11} parent=1 // pred_check
      _
    $region27: #{simclr_pointnet_forward.11} parent=1 // pred_check_branch
      %214 = sbr.rel (0) target = $region29
    $region28: #{simclr_pointnet_forward.11} parent=1 // pred_region
      %215 = dma.done [#allocation3], 32
    $region29: #{simclr_pointnet_forward.11} parent=1 // pred_fallthru
      _
    %216 = vsyncpa [#allocation3], 1

</llo_original>
